<compile_context>
chip_gen: v7x
topology: tpu7x:2x2x1
jax: 0.10.0
libtpu: 0.0.40
codegen_flags: <defaults>
</compile_context>

<pallas_src>
import collections
from functools import partial

import jax
import jax.numpy as jnp
from jax.experimental import pallas as pl
from jax.experimental.pallas import tpu as pltpu


def _round_up(x, m):
    return (x + m - 1) // m * m


def _nbytes(shape, dtype):
    n = 1
    for d in shape:
        n *= int(d)
    return n * jnp.dtype(dtype).itemsize


Meta = collections.namedtuple("Meta", ["E", "H", "De", "V", "V_pad", "TN"])


def decoder_kernel(emb_ref, hid0_ref, enc_ref, enc_flat_ref,
                   attn_wh_ref, attn_we_ref, attn_b_ref, v_ref,
                   w_ih_e_ref, w_ih_w_ref, w_hh_ref, b_ih_ref, b_hh_ref,
                   fc_w_ref, fc_b_ref,
                   pred_ref, hid_out_ref,
                   h_sc, cat_sc):
    t = pl.program_id(0)       # decode timestep (sequential: recurrence lives in h_sc)
    j = pl.program_id(1)       # vocab tile
    B, S, De = enc_ref.shape
    H = hid0_ref.shape[1]

    # ---- attention + GRU: once per timestep (first vocab tile), cached in VMEM scratch ----
    @pl.when(j == 0)
    def _():
        @pl.when(t == 0)
        def _():
            h_sc[...] = hid0_ref[...]          # load initial hidden into recurrent scratch

        emb_b = emb_ref[...]                   # [B, E] bf16 (pre-cast in glue)
        h = h_sc[...]                          # [B, H] f32 recurrent state
        h_b = h.astype(jnp.bfloat16)
        enc = enc_ref[...]                     # [B, S, De] bf16 (VMEM-resident across t, j)

        # energy = tanh(h @ Wa_h + enc @ Wa_e + ba)   (row-split weights: no in-kernel concat)
        e_h = jnp.dot(h_b, attn_wh_ref[...], preferred_element_type=jnp.float32)   # [B, H]
        e_e = jnp.dot(enc_flat_ref[...], attn_we_ref[...],
                      preferred_element_type=jnp.float32).reshape(B, S, H)          # [B, S, H]
        energy = jnp.tanh(e_h[:, None, :] + e_e + attn_b_ref[...])                  # f32

        # score on VPU/XLU (no width-1 MXU matvec); softmax denom kept EXACT because it
        # feeds the recurrent state over T steps.
        score = jnp.sum(energy * v_ref[...], axis=-1)                               # [B, S]
        score = score - jnp.max(score, axis=1, keepdims=True)
        ex = jnp.exp(score)
        attn = ex / jnp.sum(ex, axis=1, keepdims=True)

        # attention-weighted encoder sum.
        # TODO(synk): for long sources (S >~ 64) replace with a dot_general contraction over S.
        weighted = jnp.sum(attn[:, :, None] * enc.astype(jnp.float32), axis=1)      # [B, De]
        w_b = weighted.astype(jnp.bfloat16)

        # single GRU step (gate order r, z, n); row-split W_ih: no concat of [emb | weighted]
        gi = (jnp.dot(emb_b, w_ih_e_ref[...], preferred_element_type=jnp.float32)
              + jnp.dot(w_b, w_ih_w_ref[...], preferred_element_type=jnp.float32)
              + b_ih_ref[...])                                                       # [B, 3H]
        gh = jnp.dot(h_b, w_hh_ref[...], preferred_element_type=jnp.float32) + b_hh_ref[...]
        r = jax.nn.sigmoid(gi[:, :H] + gh[:, :H])
        z = jax.nn.sigmoid(gi[:, H:2 * H] + gh[:, H:2 * H])
        n = jnp.tanh(gi[:, 2 * H:] + r * gh[:, 2 * H:])
        h_new = (1.0 - z) * n + z * h                                                # [B, H] f32

        h_sc[...] = h_new                      # carry recurrence to the next timestep
        hid_out_ref[...] = h_new               # output == hidden for the single-layer GRU
        # fc_out activation concat [output | weighted | embedded], built once per timestep
        cat_sc[...] = jnp.concatenate([h_new.astype(jnp.bfloat16), w_b, emb_b], axis=1)

    # ---- fc_out: a single MXU matmul + bias per (timestep, vocab tile) ----
    pred_ref[...] = (jnp.dot(cat_sc[...], fc_w_ref[...],
                             preferred_element_type=jnp.float32) + fc_b_ref[...])


def init_params(key, output_dim, emb_dim, enc_hid_dim, dec_hid_dim):
    """PyTorch-equivalent parameters, stored in [in, out] matmul orientation."""
    ks = jax.random.split(key, 10)
    sc = 0.1
    in_rnn = enc_hid_dim * 2 + emb_dim
    in_fc = enc_hid_dim * 2 + dec_hid_dim + emb_dim
    return {
        'emb_table': sc * jax.random.normal(ks[0], (output_dim, emb_dim), jnp.float32),
        # attention: Linear(dec_hid + 2*enc_hid -> dec_hid) on cat([hidden, enc]); v: dec_hid -> 1
        'attn_w': sc * jax.random.normal(ks[1], (dec_hid_dim + enc_hid_dim * 2, dec_hid_dim), jnp.float32),
        'attn_b': sc * jax.random.normal(ks[2], (1, dec_hid_dim), jnp.float32),
        'attn_v': sc * jax.random.normal(ks[3], (dec_hid_dim, 1), jnp.float32),
        # GRU: input is cat([embedded, weighted]); gate order (r, z, n)
        'w_ih': sc * jax.random.normal(ks[4], (in_rnn, 3 * dec_hid_dim), jnp.float32),
        'w_hh': sc * jax.random.normal(ks[5], (dec_hid_dim, 3 * dec_hid_dim), jnp.float32),
        'b_ih': sc * jax.random.normal(ks[6], (1, 3 * dec_hid_dim), jnp.float32),
        'b_hh': sc * jax.random.normal(ks[7], (1, 3 * dec_hid_dim), jnp.float32),
        # fc_out: input is cat([output, weighted, embedded])
        'fc_w': sc * jax.random.normal(ks[8], (in_fc, output_dim), jnp.float32),
        'fc_b': sc * jax.random.normal(ks[9], (1, output_dim), jnp.float32),
    }


def prepare_params(params, max_tn=512):
    """One-time weight prep: row-splits for attn/GRU, vocab padding, bf16 casts.

    max_tn=512 keeps the fc-weight working set safe for v7x's 64 MiB VMEM; sweep to
    1024-2048 on v5e/v6e (128 MiB).
    """
    E = params['emb_table'].shape[1]
    H = params['w_hh'].shape[0]
    De = params['w_ih'].shape[0] - E          # 2 * enc_hid_dim
    V = params['fc_w'].shape[1]
    TN = min(max_tn, _round_up(V, 128))
    V_pad = _round_up(V, TN)
    pad_v = lambda w: jnp.pad(w, ((0, 0), (0, V_pad - V)))

    attn_w, w_ih = params['attn_w'], params['w_ih']
    prep = {
        'emb_table': params['emb_table'],
        'attn_w_h': attn_w[:H].astype(jnp.bfloat16),          # rows for hidden
        'attn_w_e': attn_w[H:].astype(jnp.bfloat16),          # rows for encoder outputs
        'attn_b': params['attn_b'],
        'attn_v': params['attn_v'].reshape(1, H),
        'w_ih_e': w_ih[:E].astype(jnp.bfloat16),              # rows for embedded
        'w_ih_w': w_ih[E:].astype(jnp.bfloat16),              # rows for weighted
        'w_hh': params['w_hh'].astype(jnp.bfloat16),
        'b_ih': params['b_ih'],
        'b_hh': params['b_hh'],
        # fc_out kept as ONE matrix (rows already ordered [output | weighted | embedded])
        # so each vocab tile is a single MXU matmul + bias.
        # TODO(synk): on v5e/v6e an int8-quantized fc_w (dequant scale on the f32 accumulator)
        # would halve the dominant weight stream; v7x MXU has no int8 (fp8 or bf16 there).
        'fc_w': pad_v(params['fc_w']).astype(jnp.bfloat16),
        'fc_b': pad_v(params['fc_b']),
    }
    return prep, Meta(E=E, H=H, De=De, V=V, V_pad=V_pad, TN=TN)


def prepare_encoder_outputs(encoder_outputs, batch_pad=16):
    """Hoisted once per sequence: seq-major [S,B,2H] -> batch-major bf16 [B_pad,S,2H],
    plus a pre-flattened [B_pad*S, 2H] view so no reshape happens inside the kernel.
    batch_pad=16 so bf16 MXU operands fill full packed sublanes."""
    S, B, De = encoder_outputs.shape
    enc = jnp.transpose(encoder_outputs, (1, 0, 2)).astype(jnp.bfloat16)
    B_pad = _round_up(B, batch_pad)
    enc = jnp.pad(enc, ((0, B_pad - B), (0, 0), (0, 0)))
    return enc, enc.reshape(B_pad * S, De)


@partial(jax.jit, static_argnames=("meta",))
def decoder_decode(input_ids_all, hidden0, enc_bmaj, enc_flat, prep, meta):
    """Teacher-forced T-step decode fused into ONE pallas_call.
       input_ids_all: [T, B] int32, hidden0: [B, dec_hid] f32,
       enc_bmaj/enc_flat: from prepare_encoder_outputs (bf16, batch padded)."""
    T, B = input_ids_all.shape
    B_pad, S, De = enc_bmaj.shape
    E, H, V, V_pad, TN = meta.E, meta.H, meta.V, meta.V_pad, meta.TN
    Din = H + De + E
    assert B_pad % 8 == 0 and B_pad >= B and De == meta.De

    # glue: embedding gather for the whole rollout (dropout == identity, eval mode),
    # bf16 cast + sublane pad of batch, done once per call.
    emb_all = prep['emb_table'][input_ids_all]                              # [T, B, E] f32
    emb_all = jnp.pad(emb_all, ((0, 0), (0, B_pad - B), (0, 0))).astype(jnp.bfloat16)
    hid0_p = jnp.pad(hidden0, ((0, B_pad - B), (0, 0)))

    n_tiles = V_pad // TN
    c2 = lambda t, j: (0, 0)
    c3 = lambda t, j: (0, 0, 0)

    in_specs = [
        pl.BlockSpec((None, B_pad, E), lambda t, j: (t, 0, 0)),    # embedded (per step)
        pl.BlockSpec((B_pad, H), c2),                              # initial hidden
        pl.BlockSpec((B_pad, S, De), c3),                          # encoder outputs (resident)
        pl.BlockSpec((B_pad * S, De), c2),                         # flat view (resident)
        pl.BlockSpec((H, H), c2),                                  # attn_w_h
        pl.BlockSpec((De, H), c2),                                 # attn_w_e
        pl.BlockSpec((1, H), c2),                                  # attn_b
        pl.BlockSpec((1, H), c2),                                  # attn_v
        pl.BlockSpec((E, 3 * H), c2),                              # w_ih_e
        pl.BlockSpec((De, 3 * H), c2),                             # w_ih_w
        pl.BlockSpec((H, 3 * H), c2),                              # w_hh
        pl.BlockSpec((1, 3 * H), c2),                              # b_ih
        pl.BlockSpec((1, 3 * H), c2),                              # b_hh
        pl.BlockSpec((Din, TN), lambda t, j: (0, j)),              # fc_w (vocab-tiled)
        pl.BlockSpec((1, TN), lambda t, j: (0, j)),                # fc_b (vocab-tiled)
    ]
    out_specs = (
        # pred kept f32 to match the module's logits; cast to bf16 here if downstream allows.
        pl.BlockSpec((None, B_pad, TN), lambda t, j: (t, 0, j)),   # predictions (lane-dense)
        pl.BlockSpec((None, B_pad, H), lambda t, j: (t, 0, 0)),    # hidden per step
    )

    # explicit VMEM budget: double-buffered blocks + scratch + headroom, capped for v7x (64 MiB)
    blocks = [((B_pad, E), jnp.bfloat16), ((B_pad, H), jnp.float32),
              ((B_pad, S, De), jnp.bfloat16), ((B_pad * S, De), jnp.bfloat16),
              ((H, H), jnp.bfloat16), ((De, H), jnp.bfloat16),
              ((1, H), jnp.float32), ((1, H), jnp.float32),
              ((E, 3 * H), jnp.bfloat16), ((De, 3 * H), jnp.bfloat16),
              ((H, 3 * H), jnp.bfloat16), ((1, 3 * H), jnp.float32), ((1, 3 * H), jnp.float32),
              ((Din, TN), jnp.bfloat16), ((1, TN), jnp.float32),
              ((B_pad, TN), jnp.float32), ((B_pad, H), jnp.float32)]
    scratch_bytes = _nbytes((B_pad, H), jnp.float32) + _nbytes((B_pad, Din), jnp.bfloat16)
    vmem_limit = min(64 << 20,
                     2 * sum(_nbytes(s, d) for s, d in blocks) + scratch_bytes + (16 << 20))

    pred_all, hid_all = pl.pallas_call(
        decoder_kernel,
        grid=(T, n_tiles),
        in_specs=in_specs,
        out_specs=out_specs,
        out_shape=(jax.ShapeDtypeStruct((T, B_pad, V_pad), jnp.float32),
                   jax.ShapeDtypeStruct((T, B_pad, H), jnp.float32)),
        scratch_shapes=[pltpu.VMEM((B_pad, H), jnp.float32),       # recurrent hidden (f32)
                        pltpu.VMEM((B_pad, Din), jnp.bfloat16)],   # fc activation concat
        compiler_params=pltpu.CompilerParams(
            # both axes "arbitrary": the recurrence carries over t, and the fc activations
            # are scratch-carried over the vocab-tile axis j.
            # TODO(synk): on v7x, split attn/GRU and fc_out into two calls (or compute the
            # small attn/GRU block per-core) so the vocab axis can be "parallel" over both TCs.
            dimension_semantics=("arbitrary", "arbitrary"),
            vmem_limit_bytes=int(vmem_limit)),
    )(emb_all, hid0_p, enc_bmaj, enc_flat,
      prep['attn_w_h'], prep['attn_w_e'], prep['attn_b'], prep['attn_v'],
      prep['w_ih_e'], prep['w_ih_w'], prep['w_hh'], prep['b_ih'], prep['b_hh'],
      prep['fc_w'], prep['fc_b'])

    return pred_all[:, :B, :V], hid_all[:, :B, :]


def decoder_step(input_ids, hidden, enc_bmaj, enc_flat, prep, meta):
    """Single decode step == the PyTorch module's forward (T=1 of the fused kernel)."""
    pred, hid = decoder_decode(input_ids[None, :], hidden, enc_bmaj, enc_flat, prep, meta)
    return pred[0], hid[0]


def reference_decode(params, input_ids_all, hidden, encoder_outputs):
    """Pure-JAX f32 reference mirroring the PyTorch Decoder (attention + GRU + fc_out)."""
    enc = jnp.transpose(encoder_outputs, (1, 0, 2))                # [B, S, De]
    H = params['w_hh'].shape[0]
    B, S, _ = enc.shape
    preds, hids = [], []
    for t in range(input_ids_all.shape[0]):
        emb = params['emb_table'][input_ids_all[t]]                # [B, E]
        h_rep = jnp.broadcast_to(hidden[:, None, :], (B, S, H))
        energy = jnp.tanh(jnp.concatenate([h_rep, enc], axis=-1) @ params['attn_w']
                          + params['attn_b'])
        score = (energy @ params['attn_v'])[..., 0]                # [B, S]
        attn = jax.nn.softmax(score, axis=1)
        weighted = jnp.einsum('bs,bsd->bd', attn, enc)
        gi = jnp.concatenate([emb, weighted], axis=1) @ params['w_ih'] + params['b_ih']
        gh = hidden @ params['w_hh'] + params['b_hh']
        r = jax.nn.sigmoid(gi[:, :H] + gh[:, :H])
        z = jax.nn.sigmoid(gi[:, H:2 * H] + gh[:, H:2 * H])
        n = jnp.tanh(gi[:, 2 * H:] + r * gh[:, 2 * H:])
        hidden = (1.0 - z) * n + z * hidden
        pred = jnp.concatenate([hidden, weighted, emb], axis=1) @ params['fc_w'] + params['fc_b']
        preds.append(pred)
        hids.append(hidden)
    return jnp.stack(preds), jnp.stack(hids)


if __name__ == "__main__":
    # small config consistent with the module
    output_dim, emb_dim, enc_hid_dim, dec_hid_dim = 64, 32, 16, 32
    B, S, T = 2, 8, 4

    key = jax.random.PRNGKey(0)
    kp, ki, kh, ke = jax.random.split(key, 4)

    params = init_params(kp, output_dim, emb_dim, enc_hid_dim, dec_hid_dim)
    prep, meta = prepare_params(params)                                   # once per model

    input_ids_all = jax.random.randint(ki, (T, B), 0, output_dim, dtype=jnp.int32)   # [T, B]
    hidden0 = jax.random.normal(kh, (B, dec_hid_dim), jnp.float32)                   # [B, dec_hid]
    encoder_outputs = jax.random.normal(ke, (S, B, enc_hid_dim * 2), jnp.float32)    # [S, B, 2*enc_hid]

    enc_bmaj, enc_flat = prepare_encoder_outputs(encoder_outputs)         # once per sequence

    # fused T-step teacher-forced decode: one pallas_call, weights resident across steps
    pred_all, hid_all = decoder_decode(input_ids_all, hidden0, enc_bmaj, enc_flat, prep, meta)
    jax.block_until_ready((pred_all, hid_all))

    # single step == the PyTorch module's forward
    pred1, hid1 = decoder_step(input_ids_all[0], hidden0, enc_bmaj, enc_flat, prep, meta)
    jax.block_until_ready((pred1, hid1))

    assert pred_all.shape == (T, B, output_dim) and hid_all.shape == (T, B, dec_hid_dim)
    assert pred1.shape == (B, output_dim) and hid1.shape == (B, dec_hid_dim)
    assert bool(jnp.all(jnp.isfinite(pred_all))) and bool(jnp.all(jnp.isfinite(hid_all)))

    # pure-JAX f32 reference over the same rollout (bf16 MXU inputs -> loose tolerance)
    ref_pred, ref_hid = reference_decode(params, input_ids_all, hidden0, encoder_outputs)
    assert bool(jnp.allclose(pred_all, ref_pred, atol=5e-2, rtol=5e-2))
    assert bool(jnp.allclose(hid_all, ref_hid, atol=5e-2, rtol=5e-2))
    assert bool(jnp.allclose(pred1, ref_pred[0], atol=5e-2, rtol=5e-2))
    assert bool(jnp.allclose(hid1, ref_hid[0], atol=5e-2, rtol=5e-2))

    print("KERNEL_OK")
</pallas_src>

<mosaic_0001>
module attributes {stable_mosaic.version = 11 : i64} {
  func.func @decoder_kernel(%arg0: i32, %arg1: i32, %arg2: memref<1x16x32xbf16, #tpu.memory_space<vmem>>, %arg3: memref<16x32xf32, #tpu.memory_space<vmem>>, %arg4: memref<16x8x32xbf16, #tpu.memory_space<vmem>>, %arg5: memref<128x32xbf16, #tpu.memory_space<vmem>>, %arg6: memref<32x32xbf16, #tpu.memory_space<vmem>>, %arg7: memref<32x32xbf16, #tpu.memory_space<vmem>>, %arg8: memref<1x32xf32, #tpu.memory_space<vmem>>, %arg9: memref<1x32xf32, #tpu.memory_space<vmem>>, %arg10: memref<32x96xbf16, #tpu.memory_space<vmem>>, %arg11: memref<32x96xbf16, #tpu.memory_space<vmem>>, %arg12: memref<32x96xbf16, #tpu.memory_space<vmem>>, %arg13: memref<1x96xf32, #tpu.memory_space<vmem>>, %arg14: memref<1x96xf32, #tpu.memory_space<vmem>>, %arg15: memref<96x128xbf16, #tpu.memory_space<vmem>>, %arg16: memref<1x128xf32, #tpu.memory_space<vmem>>, %arg17: memref<1x16x128xf32, #tpu.memory_space<vmem>>, %arg18: memref<1x16x32xf32, #tpu.memory_space<vmem>>, %arg19: memref<16x32xf32, #tpu.memory_space<vmem>>, %arg20: memref<16x96xbf16, #tpu.memory_space<vmem>>) attributes {dimension_semantics = [#tpu.dimension_semantics<arbitrary>, #tpu.dimension_semantics<arbitrary>], iteration_bounds = array<i64: 4, 1>, scalar_prefetch = 0 : i64, scratch_operands = 2 : i64, tpu.core_type = #tpu.core_type<tc>, window_params = [{transform_indices = @transform_0, window_bounds = array<i64: 1, 16, 32>}, {pipeline_mode = #tpu.pipeline_mode<synchronous>, transform_indices = @transform_1, window_bounds = array<i64: 16, 32>}, {pipeline_mode = #tpu.pipeline_mode<synchronous>, transform_indices = @transform_2, window_bounds = array<i64: 16, 8, 32>}, {pipeline_mode = #tpu.pipeline_mode<synchronous>, transform_indices = @transform_3, window_bounds = array<i64: 128, 32>}, {pipeline_mode = #tpu.pipeline_mode<synchronous>, transform_indices = @transform_4, window_bounds = array<i64: 32, 32>}, {pipeline_mode = #tpu.pipeline_mode<synchronous>, transform_indices = @transform_5, window_bounds = array<i64: 32, 32>}, {pipeline_mode = #tpu.pipeline_mode<synchronous>, transform_indices = @transform_6, window_bounds = array<i64: 1, 32>}, {pipeline_mode = #tpu.pipeline_mode<synchronous>, transform_indices = @transform_7, window_bounds = array<i64: 1, 32>}, {pipeline_mode = #tpu.pipeline_mode<synchronous>, transform_indices = @transform_8, window_bounds = array<i64: 32, 96>}, {pipeline_mode = #tpu.pipeline_mode<synchronous>, transform_indices = @transform_9, window_bounds = array<i64: 32, 96>}, {pipeline_mode = #tpu.pipeline_mode<synchronous>, transform_indices = @transform_10, window_bounds = array<i64: 32, 96>}, {pipeline_mode = #tpu.pipeline_mode<synchronous>, transform_indices = @transform_11, window_bounds = array<i64: 1, 96>}, {pipeline_mode = #tpu.pipeline_mode<synchronous>, transform_indices = @transform_12, window_bounds = array<i64: 1, 96>}, {transform_indices = @transform_13, window_bounds = array<i64: 96, 128>}, {transform_indices = @transform_14, window_bounds = array<i64: 1, 128>}, {transform_indices = @transform_15, window_bounds = array<i64: 1, 16, 128>}, {transform_indices = @transform_16, window_bounds = array<i64: 1, 16, 32>}]} {
    %c0_i32 = arith.constant 0 : i32
    %0 = arith.cmpi eq, %arg1, %c0_i32 : i32
    %1 = arith.extui %0 : i1 to i32
    %c0_i32_0 = arith.constant 0 : i32
    %2 = arith.cmpi ne, %1, %c0_i32_0 : i32
    scf.if %2 {
      %c0_i32_9 = arith.constant 0 : i32
      %12 = arith.cmpi eq, %arg0, %c0_i32_9 : i32
      %13 = arith.extui %12 : i1 to i32
      %c0_i32_10 = arith.constant 0 : i32
      %14 = arith.cmpi ne, %13, %c0_i32_10 : i32
      scf.if %14 {
        %c0_58 = arith.constant 0 : index
        %c0_59 = arith.constant 0 : index
        %100 = vector.load %arg3[%c0_58, %c0_59] : memref<16x32xf32, #tpu.memory_space<vmem>>, vector<16x32xf32>
        %c0_60 = arith.constant 0 : index
        %c0_61 = arith.constant 0 : index
        %101 = vector.load %arg19[%c0_60, %c0_61] : memref<16x32xf32, #tpu.memory_space<vmem>>, vector<16x32xf32>
        tpu.vector_store %arg19[%c0_60, %c0_61], %100 {strides = array<i32>} : memref<16x32xf32, #tpu.memory_space<vmem>>, vector<16x32xf32>,
      } else {
      }
      %c0_11 = arith.constant 0 : index
      %c0_12 = arith.constant 0 : index
      %c0_13 = arith.constant 0 : index
      %15 = vector.load %arg2[%c0_11, %c0_12, %c0_13] : memref<1x16x32xbf16, #tpu.memory_space<vmem>>, vector<1x16x32xbf16>
      %16 = vector.shape_cast %15 : vector<1x16x32xbf16> to vector<16x32xbf16>
      %c0_14 = arith.constant 0 : index
      %c0_15 = arith.constant 0 : index
      %17 = vector.load %arg19[%c0_14, %c0_15] : memref<16x32xf32, #tpu.memory_space<vmem>>, vector<16x32xf32>
      %18 = arith.truncf %17 : vector<16x32xf32> to vector<16x32xbf16>
      %c0_16 = arith.constant 0 : index
      %c0_17 = arith.constant 0 : index
      %c0_18 = arith.constant 0 : index
      %19 = vector.load %arg4[%c0_16, %c0_17, %c0_18] : memref<16x8x32xbf16, #tpu.memory_space<vmem>>, vector<16x8x32xbf16>
      %c0_19 = arith.constant 0 : index
      %c0_20 = arith.constant 0 : index
      %20 = vector.load %arg6[%c0_19, %c0_20] : memref<32x32xbf16, #tpu.memory_space<vmem>>, vector<32x32xbf16>
      %cst_21 = arith.constant dense<0.000000e+00> : vector<16x32xf32>
      %21 = tpu.matmul %18, %20, %cst_21 {dimension_numbers = #tpu.dot_dimension_numbers<[1], [0], [0], [1], [0, 0, 1, 1], [], []>} : vector<16x32xbf16>, vector<32x32xbf16>, vector<16x32xf32> -> vector<16x32xf32>
      %c0_22 = arith.constant 0 : index
      %c0_23 = arith.constant 0 : index
      %22 = vector.load %arg5[%c0_22, %c0_23] : memref<128x32xbf16, #tpu.memory_space<vmem>>, vector<128x32xbf16>
      %c0_24 = arith.constant 0 : index
      %c0_25 = arith.constant 0 : index
      %23 = vector.load %arg7[%c0_24, %c0_25] : memref<32x32xbf16, #tpu.memory_space<vmem>>, vector<32x32xbf16>
      %cst_26 = arith.constant dense<0.000000e+00> : vector<128x32xf32>
      %24 = tpu.matmul %22, %23, %cst_26 {dimension_numbers = #tpu.dot_dimension_numbers<[1], [0], [0], [1], [0, 0, 1, 1], [], []>} : vector<128x32xbf16>, vector<32x32xbf16>, vector<128x32xf32> -> vector<128x32xf32>
      %25 = vector.shape_cast %24 : vector<128x32xf32> to vector<16x8x32xf32>
      %26 = vector.shape_cast %21 : vector<16x32xf32> to vector<16x1x32xf32>
      %27 = vector.broadcast %26 : vector<16x1x32xf32> to vector<16x8x32xf32>
      %28 = arith.addf %27, %25 : vector<16x8x32xf32>
      %c0_27 = arith.constant 0 : index
      %c0_28 = arith.constant 0 : index
      %29 = vector.load %arg8[%c0_27, %c0_28] : memref<1x32xf32, #tpu.memory_space<vmem>>, vector<1x32xf32>
      %30 = vector.shape_cast %29 : vector<1x32xf32> to vector<1x1x32xf32>
      %31 = vector.broadcast %30 : vector<1x1x32xf32> to vector<16x8x32xf32>
      %32 = arith.addf %28, %31 : vector<16x8x32xf32>
      %33 = math.tanh %32 : vector<16x8x32xf32>
      %c0_29 = arith.constant 0 : index
      %c0_30 = arith.constant 0 : index
      %34 = vector.load %arg9[%c0_29, %c0_30] : memref<1x32xf32, #tpu.memory_space<vmem>>, vector<1x32xf32>
      %35 = vector.shape_cast %34 : vector<1x32xf32> to vector<1x1x32xf32>
      %36 = vector.broadcast %35 : vector<1x1x32xf32> to vector<16x8x32xf32>
      %37 = arith.mulf %33, %36 : vector<16x8x32xf32>
      %cst_31 = arith.constant dense<0.000000e+00> : vector<16x8xf32>
      %38 = vector.multi_reduction <add>, %37, %cst_31 [2] : vector<16x8x32xf32> to vector<16x8xf32>
      %cst_32 = arith.constant dense<0xFF800000> : vector<16xf32>
      %39 = vector.multi_reduction <maximumf>, %38, %cst_32 [1] : vector<16x8xf32> to vector<16xf32>
      %40 = vector.shape_cast %39 : vector<16xf32> to vector<16x1xf32>
      %41 = vector.broadcast %40 : vector<16x1xf32> to vector<16x8xf32>
      %42 = arith.subf %38, %41 : vector<16x8xf32>
      %43 = math.exp %42 : vector<16x8xf32>
      %cst_33 = arith.constant dense<0.000000e+00> : vector<16xf32>
      %44 = vector.multi_reduction <add>, %43, %cst_33 [1] : vector<16x8xf32> to vector<16xf32>
      %45 = vector.shape_cast %44 : vector<16xf32> to vector<16x1xf32>
      %46 = vector.broadcast %45 : vector<16x1xf32> to vector<16x8xf32>
      %47 = arith.divf %43, %46 : vector<16x8xf32>
      %48 = vector.shape_cast %47 : vector<16x8xf32> to vector<16x8x1xf32>
      %49 = arith.extf %19 : vector<16x8x32xbf16> to vector<16x8x32xf32>
      %50 = vector.broadcast %48 : vector<16x8x1xf32> to vector<16x8x32xf32>
      %51 = arith.mulf %50, %49 : vector<16x8x32xf32>
      %cst_34 = arith.constant dense<0.000000e+00> : vector<16x32xf32>
      %52 = vector.multi_reduction <add>, %51, %cst_34 [1] : vector<16x8x32xf32> to vector<16x32xf32>
      %53 = arith.truncf %52 : vector<16x32xf32> to vector<16x32xbf16>
      %c0_35 = arith.constant 0 : index
      %c0_36 = arith.constant 0 : index
      %54 = vector.load %arg10[%c0_35, %c0_36] : memref<32x96xbf16, #tpu.memory_space<vmem>>, vector<32x96xbf16>
      %cst_37 = arith.constant dense<0.000000e+00> : vector<16x96xf32>
      %55 = tpu.matmul %16, %54, %cst_37 {dimension_numbers = #tpu.dot_dimension_numbers<[1], [0], [0], [1], [0, 0, 1, 1], [], []>} : vector<16x32xbf16>, vector<32x96xbf16>, vector<16x96xf32> -> vector<16x96xf32>
      %c0_38 = arith.constant 0 : index
      %c0_39 = arith.constant 0 : index
      %56 = vector.load %arg11[%c0_38, %c0_39] : memref<32x96xbf16, #tpu.memory_space<vmem>>, vector<32x96xbf16>
      %cst_40 = arith.constant dense<0.000000e+00> : vector<16x96xf32>
      %57 = tpu.matmul %53, %56, %cst_40 {dimension_numbers = #tpu.dot_dimension_numbers<[1], [0], [0], [1], [0, 0, 1, 1], [], []>} : vector<16x32xbf16>, vector<32x96xbf16>, vector<16x96xf32> -> vector<16x96xf32>
      %58 = arith.addf %55, %57 : vector<16x96xf32>
      %c0_41 = arith.constant 0 : index
      %c0_42 = arith.constant 0 : index
      %59 = vector.load %arg13[%c0_41, %c0_42] : memref<1x96xf32, #tpu.memory_space<vmem>>, vector<1x96xf32>
      %60 = vector.broadcast %59 : vector<1x96xf32> to vector<16x96xf32>
      %61 = arith.addf %58, %60 : vector<16x96xf32>
      %c0_43 = arith.constant 0 : index
      %c0_44 = arith.constant 0 : index
      %62 = vector.load %arg12[%c0_43, %c0_44] : memref<32x96xbf16, #tpu.memory_space<vmem>>, vector<32x96xbf16>
      %cst_45 = arith.constant dense<0.000000e+00> : vector<16x96xf32>
      %63 = tpu.matmul %18, %62, %cst_45 {dimension_numbers = #tpu.dot_dimension_numbers<[1], [0], [0], [1], [0, 0, 1, 1], [], []>} : vector<16x32xbf16>, vector<32x96xbf16>, vector<16x96xf32> -> vector<16x96xf32>
      %c0_46 = arith.constant 0 : index
      %c0_47 = arith.constant 0 : index
      %64 = vector.load %arg14[%c0_46, %c0_47] : memref<1x96xf32, #tpu.memory_space<vmem>>, vector<1x96xf32>
      %65 = vector.broadcast %64 : vector<1x96xf32> to vector<16x96xf32>
      %66 = arith.addf %63, %65 : vector<16x96xf32>
      %67 = vector.extract_strided_slice %61 {offsets = [0, 0], sizes = [16, 32], strides = [1, 1]} : vector<16x96xf32> to vector<16x32xf32>
      %68 = vector.extract_strided_slice %66 {offsets = [0, 0], sizes = [16, 32], strides = [1, 1]} : vector<16x96xf32> to vector<16x32xf32>
      %69 = arith.addf %67, %68 : vector<16x32xf32>
      %70 = arith.negf %69 : vector<16x32xf32>
      %71 = math.exp %70 : vector<16x32xf32>
      %cst_48 = arith.constant 1.000000e+00 : f32
      %72 = vector.broadcast %cst_48 : f32 to vector<16x32xf32>
      %73 = arith.addf %72, %71 : vector<16x32xf32>
      %74 = arith.divf %72, %73 : vector<16x32xf32>
      %75 = vector.extract_strided_slice %61 {offsets = [0, 32], sizes = [16, 32], strides = [1, 1]} : vector<16x96xf32> to vector<16x32xf32>
      %76 = vector.extract_strided_slice %66 {offsets = [0, 32], sizes = [16, 32], strides = [1, 1]} : vector<16x96xf32> to vector<16x32xf32>
      %77 = arith.addf %75, %76 : vector<16x32xf32>
      %78 = arith.negf %77 : vector<16x32xf32>
      %79 = math.exp %78 : vector<16x32xf32>
      %cst_49 = arith.constant 1.000000e+00 : f32
      %80 = vector.broadcast %cst_49 : f32 to vector<16x32xf32>
      %81 = arith.addf %80, %79 : vector<16x32xf32>
      %82 = arith.divf %80, %81 : vector<16x32xf32>
      %83 = vector.extract_strided_slice %61 {offsets = [0, 64], sizes = [16, 32], strides = [1, 1]} : vector<16x96xf32> to vector<16x32xf32>
      %84 = vector.extract_strided_slice %66 {offsets = [0, 64], sizes = [16, 32], strides = [1, 1]} : vector<16x96xf32> to vector<16x32xf32>
      %85 = arith.mulf %74, %84 : vector<16x32xf32>
      %86 = arith.addf %83, %85 : vector<16x32xf32>
      %87 = math.tanh %86 : vector<16x32xf32>
      %cst_50 = arith.constant 1.000000e+00 : f32
      %88 = vector.broadcast %cst_50 : f32 to vector<16x32xf32>
      %89 = arith.subf %88, %82 : vector<16x32xf32>
      %90 = arith.mulf %89, %87 : vector<16x32xf32>
      %91 = arith.mulf %82, %17 : vector<16x32xf32>
      %92 = arith.addf %90, %91 : vector<16x32xf32>
      %c0_51 = arith.constant 0 : index
      %c0_52 = arith.constant 0 : index
      %93 = vector.load %arg19[%c0_51, %c0_52] : memref<16x32xf32, #tpu.memory_space<vmem>>, vector<16x32xf32>
      tpu.vector_store %arg19[%c0_51, %c0_52], %92 {strides = array<i32>} : memref<16x32xf32, #tpu.memory_space<vmem>>, vector<16x32xf32>,
      %c0_53 = arith.constant 0 : index
      %c0_54 = arith.constant 0 : index
      %c0_55 = arith.constant 0 : index
      %94 = vector.load %arg18[%c0_53, %c0_54, %c0_55] : memref<1x16x32xf32, #tpu.memory_space<vmem>>, vector<1x16x32xf32>
      %95 = vector.shape_cast %94 : vector<1x16x32xf32> to vector<16x32xf32>
      %96 = vector.shape_cast %92 : vector<16x32xf32> to vector<1x16x32xf32>
      tpu.vector_store %arg18[%c0_53, %c0_54, %c0_55], %96 {strides = array<i32>} : memref<1x16x32xf32, #tpu.memory_space<vmem>>, vector<1x16x32xf32>,
      %97 = arith.truncf %92 : vector<16x32xf32> to vector<16x32xbf16>
      %98 = tpu.concatenate %97, %53, %16 in 1 : vector<16x32xbf16>, vector<16x32xbf16>, vector<16x32xbf16> -> vector<16x96xbf16>
      %c0_56 = arith.constant 0 : index
      %c0_57 = arith.constant 0 : index
      %99 = vector.load %arg20[%c0_56, %c0_57] : memref<16x96xbf16, #tpu.memory_space<vmem>>, vector<16x96xbf16>
      tpu.vector_store %arg20[%c0_56, %c0_57], %98 {strides = array<i32>} : memref<16x96xbf16, #tpu.memory_space<vmem>>, vector<16x96xbf16>,
    } else {
    }
    %c0 = arith.constant 0 : index
    %c0_1 = arith.constant 0 : index
    %3 = vector.load %arg20[%c0, %c0_1] : memref<16x96xbf16, #tpu.memory_space<vmem>>, vector<16x96xbf16>
    %c0_2 = arith.constant 0 : index
    %c0_3 = arith.constant 0 : index
    %4 = vector.load %arg15[%c0_2, %c0_3] : memref<96x128xbf16, #tpu.memory_space<vmem>>, vector<96x128xbf16>
    %cst = arith.constant dense<0.000000e+00> : vector<16x128xf32>
    %5 = tpu.matmul %3, %4, %cst {dimension_numbers = #tpu.dot_dimension_numbers<[1], [0], [0], [1], [0, 0, 1, 1], [], []>} : vector<16x96xbf16>, vector<96x128xbf16>, vector<16x128xf32> -> vector<16x128xf32>
    %c0_4 = arith.constant 0 : index
    %c0_5 = arith.constant 0 : index
    %6 = vector.load %arg16[%c0_4, %c0_5] : memref<1x128xf32, #tpu.memory_space<vmem>>, vector<1x128xf32>
    %7 = vector.broadcast %6 : vector<1x128xf32> to vector<16x128xf32>
    %8 = arith.addf %5, %7 : vector<16x128xf32>
    %c0_6 = arith.constant 0 : index
    %c0_7 = arith.constant 0 : index
    %c0_8 = arith.constant 0 : index
    %9 = vector.load %arg17[%c0_6, %c0_7, %c0_8] : memref<1x16x128xf32, #tpu.memory_space<vmem>>, vector<1x16x128xf32>
    %10 = vector.shape_cast %9 : vector<1x16x128xf32> to vector<16x128xf32>
    %11 = vector.shape_cast %8 : vector<16x128xf32> to vector<1x16x128xf32>
    tpu.vector_store %arg17[%c0_6, %c0_7, %c0_8], %11 {strides = array<i32>} : memref<1x16x128xf32, #tpu.memory_space<vmem>>, vector<1x16x128xf32>,
    return
  }
  func.func @transform_0(%arg0: i32, %arg1: i32) -> (i32, i32, i32) {
    %c0_i32 = arith.constant 0 : i32
    %c0_i32_0 = arith.constant 0 : i32
    %c0_i32_1 = arith.constant 0 : i32
    return %arg0, %c0_i32, %c0_i32_0 : i32, i32, i32
  }
  func.func @transform_1(%arg0: i32, %arg1: i32) -> (i32, i32) {
    %c0_i32 = arith.constant 0 : i32
    %c0_i32_0 = arith.constant 0 : i32
    %c0_i32_1 = arith.constant 0 : i32
    return %c0_i32, %c0_i32_0 : i32, i32
  }
  func.func @transform_2(%arg0: i32, %arg1: i32) -> (i32, i32, i32) {
    %c0_i32 = arith.constant 0 : i32
    %c0_i32_0 = arith.constant 0 : i32
    %c0_i32_1 = arith.constant 0 : i32
    %c0_i32_2 = arith.constant 0 : i32
    return %c0_i32, %c0_i32_0, %c0_i32_1 : i32, i32, i32
  }
  func.func @transform_3(%arg0: i32, %arg1: i32) -> (i32, i32) {
    %c0_i32 = arith.constant 0 : i32
    %c0_i32_0 = arith.constant 0 : i32
    %c0_i32_1 = arith.constant 0 : i32
    return %c0_i32, %c0_i32_0 : i32, i32
  }
  func.func @transform_4(%arg0: i32, %arg1: i32) -> (i32, i32) {
    %c0_i32 = arith.constant 0 : i32
    %c0_i32_0 = arith.constant 0 : i32
    %c0_i32_1 = arith.constant 0 : i32
    return %c0_i32, %c0_i32_0 : i32, i32
  }
  func.func @transform_5(%arg0: i32, %arg1: i32) -> (i32, i32) {
    %c0_i32 = arith.constant 0 : i32
    %c0_i32_0 = arith.constant 0 : i32
    %c0_i32_1 = arith.constant 0 : i32
    return %c0_i32, %c0_i32_0 : i32, i32
  }
  func.func @transform_6(%arg0: i32, %arg1: i32) -> (i32, i32) {
    %c0_i32 = arith.constant 0 : i32
    %c0_i32_0 = arith.constant 0 : i32
    %c0_i32_1 = arith.constant 0 : i32
    return %c0_i32, %c0_i32_0 : i32, i32
  }
  func.func @transform_7(%arg0: i32, %arg1: i32) -> (i32, i32) {
    %c0_i32 = arith.constant 0 : i32
    %c0_i32_0 = arith.constant 0 : i32
    %c0_i32_1 = arith.constant 0 : i32
    return %c0_i32, %c0_i32_0 : i32, i32
  }
  func.func @transform_8(%arg0: i32, %arg1: i32) -> (i32, i32) {
    %c0_i32 = arith.constant 0 : i32
    %c0_i32_0 = arith.constant 0 : i32
    %c0_i32_1 = arith.constant 0 : i32
    return %c0_i32, %c0_i32_0 : i32, i32
  }
  func.func @transform_9(%arg0: i32, %arg1: i32) -> (i32, i32) {
    %c0_i32 = arith.constant 0 : i32
    %c0_i32_0 = arith.constant 0 : i32
    %c0_i32_1 = arith.constant 0 : i32
    return %c0_i32, %c0_i32_0 : i32, i32
  }
  func.func @transform_10(%arg0: i32, %arg1: i32) -> (i32, i32) {
    %c0_i32 = arith.constant 0 : i32
    %c0_i32_0 = arith.constant 0 : i32
    %c0_i32_1 = arith.constant 0 : i32
    return %c0_i32, %c0_i32_0 : i32, i32
  }
  func.func @transform_11(%arg0: i32, %arg1: i32) -> (i32, i32) {
    %c0_i32 = arith.constant 0 : i32
    %c0_i32_0 = arith.constant 0 : i32
    %c0_i32_1 = arith.constant 0 : i32
    return %c0_i32, %c0_i32_0 : i32, i32
  }
  func.func @transform_12(%arg0: i32, %arg1: i32) -> (i32, i32) {
    %c0_i32 = arith.constant 0 : i32
    %c0_i32_0 = arith.constant 0 : i32
    %c0_i32_1 = arith.constant 0 : i32
    return %c0_i32, %c0_i32_0 : i32, i32
  }
  func.func @transform_13(%arg0: i32, %arg1: i32) -> (i32, i32) {
    %c0_i32 = arith.constant 0 : i32
    %c0_i32_0 = arith.constant 0 : i32
    return %c0_i32, %arg1 : i32, i32
  }
  func.func @transform_14(%arg0: i32, %arg1: i32) -> (i32, i32) {
    %c0_i32 = arith.constant 0 : i32
    %c0_i32_0 = arith.constant 0 : i32
    return %c0_i32, %arg1 : i32, i32
  }
  func.func @transform_15(%arg0: i32, %arg1: i32) -> (i32, i32, i32) {
    %c0_i32 = arith.constant 0 : i32
    %c0_i32_0 = arith.constant 0 : i32
    return %arg0, %c0_i32, %arg1 : i32, i32, i32
  }
  func.func @transform_16(%arg0: i32, %arg1: i32) -> (i32, i32, i32) {
    %c0_i32 = arith.constant 0 : i32
    %c0_i32_0 = arith.constant 0 : i32
    %c0_i32_1 = arith.constant 0 : i32
    return %arg0, %c0_i32, %c0_i32_0 : i32, i32, i32
  }
}

</mosaic_0001>

<llo_original>
// kernel: decoder_decode.1
$region0: #{decoder_decode.1}
  #allocation0 [shape = 'u32[]', space=smem, size = 0x4, offset = 0x4, fixed_abs, tag = 'smem constant byte address 0x4 - core index']
  #allocation1 [shape = 'u32[144,128]{1,0:T(1,128)}', space=vmem, size = 0x12000, scoped, tag = 'internal scratch']
  #allocation2 [shape = 'f32[16,32]{1,0:T(8,128)}', space=vmem, size = 0x2000, scoped, tag = 'scratch operand']
  #allocation3 [shape = 'bf16[16,96]{1,0:T(16,128)(2,1)}', space=vmem, size = 0x1000, scoped, tag = 'scratch operand']
  %s0 = inlined_call_operand.vmem [shape: bf16[4,16,32], index: 0, kind: input, shape index: {}]
  %s1 = inlined_call_operand.vmem [shape: f32[16,32], index: 1, kind: input, shape index: {}]
  %s2 = inlined_call_operand.vmem [shape: bf16[16,8,32], index: 2, kind: input, shape index: {}]
  %s3 = inlined_call_operand.vmem [shape: bf16[128,32], index: 3, kind: input, shape index: {}]
  %s4 = inlined_call_operand.vmem [shape: bf16[32,32], index: 4, kind: input, shape index: {}]
  %s5 = inlined_call_operand.vmem [shape: bf16[32,32], index: 5, kind: input, shape index: {}]
  %s6 = inlined_call_operand.vmem [shape: f32[1,32], index: 6, kind: input, shape index: {}]
  %s7 = inlined_call_operand.vmem [shape: f32[1,32], index: 7, kind: input, shape index: {}]
  %s8 = inlined_call_operand.vmem [shape: bf16[32,96], index: 8, kind: input, shape index: {}]
  %s9 = inlined_call_operand.vmem [shape: bf16[32,96], index: 9, kind: input, shape index: {}]
  %s10 = inlined_call_operand.vmem [shape: bf16[32,96], index: 10, kind: input, shape index: {}]
  %s11 = inlined_call_operand.vmem [shape: f32[1,96], index: 11, kind: input, shape index: {}]
  %s12 = inlined_call_operand.vmem [shape: f32[1,96], index: 12, kind: input, shape index: {}]
  %s13 = inlined_call_operand.vmem [shape: bf16[96,128], index: 13, kind: input, shape index: {}]
  %s14 = inlined_call_operand.vmem [shape: f32[1,128], index: 14, kind: input, shape index: {}]
  %s15 = inlined_call_operand.vmem [shape: f32[4,16,128], index: 15, kind: output, shape index: {0}]
  %s16 = inlined_call_operand.vmem [shape: f32[4,16,32], index: 16, kind: output, shape index: {1}]
  %17 = xla_tuple %s15, %s16
  %s18 = sld [smem:[#allocation0]]
  $region109: #{decoder_decode.1} parent=0
    _
  %s20 = ssub.s32 1, %s18
  %s21 = scalar_select 0, %s20, %s18
  loop: start=0, step=1, limit=6
  $region2: #{decoder_decode.1} parent=0 // loop_pre_header
    _
  $region3: #{decoder_decode.1} parent=0 // loop_header
    %s23 = sphi 0, %s27
    %p24 = scmp.ge.s32.totalorder %s23, 6
    %s30 = sphi 0, %s42
    %s31 = sphi 0, %s38
    %s32 = sphi 0, %s30
    %s33 = sphi 0, %s31
    %s34 = sphi 0, %s32
    %s35 = sphi 0, %s33
    %s45 = sphi 0, %s47
    %s48 = sphi 0, %s45
    %s49 = sphi 0, %s48
    %s65 = sphi 0, %s49
    %s69 = sphi 0, %s69
    %s71 = sphi 0, %s69
    %s72 = sphi 0, %s71
    %s86 = sphi 0, %s72
    %s90 = sphi 0, %s90
    %s92 = sphi 0, %s90
    %s93 = sphi 0, %s92
    %s107 = sphi 0, %s93
    %s111 = sphi 0, %s111
    %s113 = sphi 0, %s111
    %s114 = sphi 0, %s113
    %s128 = sphi 0, %s114
    %s132 = sphi 0, %s132
    %s134 = sphi 0, %s132
    %s135 = sphi 0, %s134
    %s149 = sphi 0, %s135
    %s153 = sphi 0, %s153
    %s155 = sphi 0, %s153
    %s156 = sphi 0, %s155
    %s170 = sphi 0, %s156
    %s174 = sphi 0, %s174
    %s176 = sphi 0, %s174
    %s177 = sphi 0, %s176
    %s191 = sphi 0, %s177
    %s195 = sphi 0, %s195
    %s197 = sphi 0, %s195
    %s198 = sphi 0, %s197
    %s212 = sphi 0, %s198
    %s216 = sphi 0, %s216
    %s218 = sphi 0, %s216
    %s219 = sphi 0, %s218
    %s233 = sphi 0, %s219
    %s237 = sphi 0, %s237
    %s239 = sphi 0, %s237
    %s240 = sphi 0, %s239
    %s254 = sphi 0, %s240
    %s258 = sphi 0, %s258
    %s260 = sphi 0, %s258
    %s261 = sphi 0, %s260
    %s275 = sphi 0, %s261
    %s279 = sphi 0, %s279
    %s281 = sphi 0, %s279
    %s282 = sphi 0, %s281
    %s296 = sphi 0, %s282
    %s300 = sphi 0, %s300
    %s302 = sphi 0, %s300
    %s303 = sphi 0, %s302
    %s317 = sphi 0, %s303
    %s323 = sphi 0, %s325
    %s326 = sphi 0, %s323
    %s327 = sphi 0, %s326
    %s343 = sphi 0, %s327
    %s349 = sphi 0, %s351
    %s352 = sphi 0, %s349
    %s353 = sphi 0, %s352
    %s369 = sphi 0, %s353
    %s377 = sphi 0, %s379
    %s380 = sphi 0, %s377
    %s381 = sphi 0, %s380
    %s397 = sphi 0, %s381
    %s403 = sphi 0, %s405
    %s406 = sphi 0, %s403
    %s407 = sphi 0, %s406
    %s423 = sphi 0, %s407
  $region4: #{decoder_decode.1} parent=0 // loop_header_branch
    %26 = sbr.rel (%p24) target = $region8
  $region5: #{decoder_decode.1} parent=0 // loop_body
    %s28 = ssub.s32 %s23, 1
    %s29 = ssub.s32 %s23, 2
    %s36 = sadd.s32 1, %s31
    %p37 = scmp.ge.s32.totalorder %s36, 1
    %s38 = scalar_select %p37, 0, %s36
    %s39 = sadd.s32 1, %s30
    %s40 = scalar_select %p37, %s39, %s30
    %p41 = scmp.ge.s32.totalorder %s40, 4
    %s42 = scalar_select %p41, 0, %s40
    %s43 = ssub.s32 %s30, %s42
    %p44 = scmp.eq.s32.totalorder %s43, 0
    %s46 = sadd.s32 %s45, 1
    %s47 = scalar_select %p44, %s45, %s46
    %p50 = pneg %p44
    %p51 = scmp.eq.s32.totalorder %s23, 3
    %p52 = por %p50, %p51
    %p53 = scmp.ne.s32.totalorder %s45, %s48
    %p54 = scmp.eq.s32.totalorder %s23, 0
    %p55 = por %p53, %p54
    %p56 = scmp.ne.s32.totalorder %s45, %s48
    %p57 = scmp.eq.s32.totalorder %s28, 3
    %p58 = por %p56, %p57
    %p59 = scmp.ne.s32.totalorder %s48, %s49
    %p60 = scmp.eq.s32.totalorder %s28, 0
    %p61 = por %p59, %p60
    %p62 = scmp.ne.s32.totalorder %s48, %s49
    %p63 = scmp.eq.s32.totalorder %s29, 3
    %p64 = por %p62, %p63
    %p66 = scmp.ne.s32.totalorder %s49, %s65
    %p67 = scmp.eq.s32.totalorder %s29, 0
    %p68 = por %p66, %p67
    %s70 = sadd.s32 %s69, 1
    %p73 = scmp.eq.s32.totalorder %s23, 3
    %p74 = scmp.ne.s32.totalorder %s69, %s71
    %p75 = scmp.eq.s32.totalorder %s23, 0
    %p76 = por %p74, %p75
    %p77 = scmp.ne.s32.totalorder %s69, %s71
    %p78 = scmp.eq.s32.totalorder %s28, 3
    %p79 = por %p77, %p78
    %p80 = scmp.ne.s32.totalorder %s71, %s72
    %p81 = scmp.eq.s32.totalorder %s28, 0
    %p82 = por %p80, %p81
    %p83 = scmp.ne.s32.totalorder %s71, %s72
    %p84 = scmp.eq.s32.totalorder %s29, 3
    %p85 = por %p83, %p84
    %p87 = scmp.ne.s32.totalorder %s72, %s86
    %p88 = scmp.eq.s32.totalorder %s29, 0
    %p89 = por %p87, %p88
    %s91 = sadd.s32 %s90, 1
    %p94 = scmp.eq.s32.totalorder %s23, 3
    %p95 = scmp.ne.s32.totalorder %s90, %s92
    %p96 = scmp.eq.s32.totalorder %s23, 0
    %p97 = por %p95, %p96
    %p98 = scmp.ne.s32.totalorder %s90, %s92
    %p99 = scmp.eq.s32.totalorder %s28, 3
    %p100 = por %p98, %p99
    %p101 = scmp.ne.s32.totalorder %s92, %s93
    %p102 = scmp.eq.s32.totalorder %s28, 0
    %p103 = por %p101, %p102
    %p104 = scmp.ne.s32.totalorder %s92, %s93
    %p105 = scmp.eq.s32.totalorder %s29, 3
    %p106 = por %p104, %p105
    %p108 = scmp.ne.s32.totalorder %s93, %s107
    %p109 = scmp.eq.s32.totalorder %s29, 0
    %p110 = por %p108, %p109
    %s112 = sadd.s32 %s111, 1
    %p115 = scmp.eq.s32.totalorder %s23, 3
    %p116 = scmp.ne.s32.totalorder %s111, %s113
    %p117 = scmp.eq.s32.totalorder %s23, 0
    %p118 = por %p116, %p117
    %p119 = scmp.ne.s32.totalorder %s111, %s113
    %p120 = scmp.eq.s32.totalorder %s28, 3
    %p121 = por %p119, %p120
    %p122 = scmp.ne.s32.totalorder %s113, %s114
    %p123 = scmp.eq.s32.totalorder %s28, 0
    %p124 = por %p122, %p123
    %p125 = scmp.ne.s32.totalorder %s113, %s114
    %p126 = scmp.eq.s32.totalorder %s29, 3
    %p127 = por %p125, %p126
    %p129 = scmp.ne.s32.totalorder %s114, %s128
    %p130 = scmp.eq.s32.totalorder %s29, 0
    %p131 = por %p129, %p130
    %s133 = sadd.s32 %s132, 1
    %p136 = scmp.eq.s32.totalorder %s23, 3
    %p137 = scmp.ne.s32.totalorder %s132, %s134
    %p138 = scmp.eq.s32.totalorder %s23, 0
    %p139 = por %p137, %p138
    %p140 = scmp.ne.s32.totalorder %s132, %s134
    %p141 = scmp.eq.s32.totalorder %s28, 3
    %p142 = por %p140, %p141
    %p143 = scmp.ne.s32.totalorder %s134, %s135
    %p144 = scmp.eq.s32.totalorder %s28, 0
    %p145 = por %p143, %p144
    %p146 = scmp.ne.s32.totalorder %s134, %s135
    %p147 = scmp.eq.s32.totalorder %s29, 3
    %p148 = por %p146, %p147
    %p150 = scmp.ne.s32.totalorder %s135, %s149
    %p151 = scmp.eq.s32.totalorder %s29, 0
    %p152 = por %p150, %p151
    %s154 = sadd.s32 %s153, 1
    %p157 = scmp.eq.s32.totalorder %s23, 3
    %p158 = scmp.ne.s32.totalorder %s153, %s155
    %p159 = scmp.eq.s32.totalorder %s23, 0
    %p160 = por %p158, %p159
    %p161 = scmp.ne.s32.totalorder %s153, %s155
    %p162 = scmp.eq.s32.totalorder %s28, 3
    %p163 = por %p161, %p162
    %p164 = scmp.ne.s32.totalorder %s155, %s156
    %p165 = scmp.eq.s32.totalorder %s28, 0
    %p166 = por %p164, %p165
    %p167 = scmp.ne.s32.totalorder %s155, %s156
    %p168 = scmp.eq.s32.totalorder %s29, 3
    %p169 = por %p167, %p168
    %p171 = scmp.ne.s32.totalorder %s156, %s170
    %p172 = scmp.eq.s32.totalorder %s29, 0
    %p173 = por %p171, %p172
    %s175 = sadd.s32 %s174, 1
    %p178 = scmp.eq.s32.totalorder %s23, 3
    %p179 = scmp.ne.s32.totalorder %s174, %s176
    %p180 = scmp.eq.s32.totalorder %s23, 0
    %p181 = por %p179, %p180
    %p182 = scmp.ne.s32.totalorder %s174, %s176
    %p183 = scmp.eq.s32.totalorder %s28, 3
    %p184 = por %p182, %p183
    %p185 = scmp.ne.s32.totalorder %s176, %s177
    %p186 = scmp.eq.s32.totalorder %s28, 0
    %p187 = por %p185, %p186
    %p188 = scmp.ne.s32.totalorder %s176, %s177
    %p189 = scmp.eq.s32.totalorder %s29, 3
    %p190 = por %p188, %p189
    %p192 = scmp.ne.s32.totalorder %s177, %s191
    %p193 = scmp.eq.s32.totalorder %s29, 0
    %p194 = por %p192, %p193
    %s196 = sadd.s32 %s195, 1
    %p199 = scmp.eq.s32.totalorder %s23, 3
    %p200 = scmp.ne.s32.totalorder %s195, %s197
    %p201 = scmp.eq.s32.totalorder %s23, 0
    %p202 = por %p200, %p201
    %p203 = scmp.ne.s32.totalorder %s195, %s197
    %p204 = scmp.eq.s32.totalorder %s28, 3
    %p205 = por %p203, %p204
    %p206 = scmp.ne.s32.totalorder %s197, %s198
    %p207 = scmp.eq.s32.totalorder %s28, 0
    %p208 = por %p206, %p207
    %p209 = scmp.ne.s32.totalorder %s197, %s198
    %p210 = scmp.eq.s32.totalorder %s29, 3
    %p211 = por %p209, %p210
    %p213 = scmp.ne.s32.totalorder %s198, %s212
    %p214 = scmp.eq.s32.totalorder %s29, 0
    %p215 = por %p213, %p214
    %s217 = sadd.s32 %s216, 1
    %p220 = scmp.eq.s32.totalorder %s23, 3
    %p221 = scmp.ne.s32.totalorder %s216, %s218
    %p222 = scmp.eq.s32.totalorder %s23, 0
    %p223 = por %p221, %p222
    %p224 = scmp.ne.s32.totalorder %s216, %s218
    %p225 = scmp.eq.s32.totalorder %s28, 3
    %p226 = por %p224, %p225
    %p227 = scmp.ne.s32.totalorder %s218, %s219
    %p228 = scmp.eq.s32.totalorder %s28, 0
    %p229 = por %p227, %p228
    %p230 = scmp.ne.s32.totalorder %s218, %s219
    %p231 = scmp.eq.s32.totalorder %s29, 3
    %p232 = por %p230, %p231
    %p234 = scmp.ne.s32.totalorder %s219, %s233
    %p235 = scmp.eq.s32.totalorder %s29, 0
    %p236 = por %p234, %p235
    %s238 = sadd.s32 %s237, 1
    %p241 = scmp.eq.s32.totalorder %s23, 3
    %p242 = scmp.ne.s32.totalorder %s237, %s239
    %p243 = scmp.eq.s32.totalorder %s23, 0
    %p244 = por %p242, %p243
    %p245 = scmp.ne.s32.totalorder %s237, %s239
    %p246 = scmp.eq.s32.totalorder %s28, 3
    %p247 = por %p245, %p246
    %p248 = scmp.ne.s32.totalorder %s239, %s240
    %p249 = scmp.eq.s32.totalorder %s28, 0
    %p250 = por %p248, %p249
    %p251 = scmp.ne.s32.totalorder %s239, %s240
    %p252 = scmp.eq.s32.totalorder %s29, 3
    %p253 = por %p251, %p252
    %p255 = scmp.ne.s32.totalorder %s240, %s254
    %p256 = scmp.eq.s32.totalorder %s29, 0
    %p257 = por %p255, %p256
    %s259 = sadd.s32 %s258, 1
    %p262 = scmp.eq.s32.totalorder %s23, 3
    %p263 = scmp.ne.s32.totalorder %s258, %s260
    %p264 = scmp.eq.s32.totalorder %s23, 0
    %p265 = por %p263, %p264
    %p266 = scmp.ne.s32.totalorder %s258, %s260
    %p267 = scmp.eq.s32.totalorder %s28, 3
    %p268 = por %p266, %p267
    %p269 = scmp.ne.s32.totalorder %s260, %s261
    %p270 = scmp.eq.s32.totalorder %s28, 0
    %p271 = por %p269, %p270
    %p272 = scmp.ne.s32.totalorder %s260, %s261
    %p273 = scmp.eq.s32.totalorder %s29, 3
    %p274 = por %p272, %p273
    %p276 = scmp.ne.s32.totalorder %s261, %s275
    %p277 = scmp.eq.s32.totalorder %s29, 0
    %p278 = por %p276, %p277
    %s280 = sadd.s32 %s279, 1
    %p283 = scmp.eq.s32.totalorder %s23, 3
    %p284 = scmp.ne.s32.totalorder %s279, %s281
    %p285 = scmp.eq.s32.totalorder %s23, 0
    %p286 = por %p284, %p285
    %p287 = scmp.ne.s32.totalorder %s279, %s281
    %p288 = scmp.eq.s32.totalorder %s28, 3
    %p289 = por %p287, %p288
    %p290 = scmp.ne.s32.totalorder %s281, %s282
    %p291 = scmp.eq.s32.totalorder %s28, 0
    %p292 = por %p290, %p291
    %p293 = scmp.ne.s32.totalorder %s281, %s282
    %p294 = scmp.eq.s32.totalorder %s29, 3
    %p295 = por %p293, %p294
    %p297 = scmp.ne.s32.totalorder %s282, %s296
    %p298 = scmp.eq.s32.totalorder %s29, 0
    %p299 = por %p297, %p298
    %s301 = sadd.s32 %s300, 1
    %p304 = scmp.eq.s32.totalorder %s23, 3
    %p305 = scmp.ne.s32.totalorder %s300, %s302
    %p306 = scmp.eq.s32.totalorder %s23, 0
    %p307 = por %p305, %p306
    %p308 = scmp.ne.s32.totalorder %s300, %s302
    %p309 = scmp.eq.s32.totalorder %s28, 3
    %p310 = por %p308, %p309
    %p311 = scmp.ne.s32.totalorder %s302, %s303
    %p312 = scmp.eq.s32.totalorder %s28, 0
    %p313 = por %p311, %p312
    %p314 = scmp.ne.s32.totalorder %s302, %s303
    %p315 = scmp.eq.s32.totalorder %s29, 3
    %p316 = por %p314, %p315
    %p318 = scmp.ne.s32.totalorder %s303, %s317
    %p319 = scmp.eq.s32.totalorder %s29, 0
    %p320 = por %p318, %p319
    %s321 = ssub.s32 %s31, %s38
    %p322 = scmp.eq.s32.totalorder %s321, 0
    %s324 = sadd.s32 %s323, 1
    %s325 = scalar_select %p322, %s323, %s324
    %p328 = pneg %p322
    %p329 = scmp.eq.s32.totalorder %s23, 3
    %p330 = por %p328, %p329
    %p331 = scmp.ne.s32.totalorder %s323, %s326
    %p332 = scmp.eq.s32.totalorder %s23, 0
    %p333 = por %p331, %p332
    %p334 = scmp.ne.s32.totalorder %s323, %s326
    %p335 = scmp.eq.s32.totalorder %s28, 3
    %p336 = por %p334, %p335
    %p337 = scmp.ne.s32.totalorder %s326, %s327
    %p338 = scmp.eq.s32.totalorder %s28, 0
    %p339 = por %p337, %p338
    %p340 = scmp.ne.s32.totalorder %s326, %s327
    %p341 = scmp.eq.s32.totalorder %s29, 3
    %p342 = por %p340, %p341
    %p344 = scmp.ne.s32.totalorder %s327, %s343
    %p345 = scmp.eq.s32.totalorder %s29, 0
    %p346 = por %p344, %p345
    %s347 = ssub.s32 %s31, %s38
    %p348 = scmp.eq.s32.totalorder %s347, 0
    %s350 = sadd.s32 %s349, 1
    %s351 = scalar_select %p348, %s349, %s350
    %p354 = pneg %p348
    %p355 = scmp.eq.s32.totalorder %s23, 3
    %p356 = por %p354, %p355
    %p357 = scmp.ne.s32.totalorder %s349, %s352
    %p358 = scmp.eq.s32.totalorder %s23, 0
    %p359 = por %p357, %p358
    %p360 = scmp.ne.s32.totalorder %s349, %s352
    %p361 = scmp.eq.s32.totalorder %s28, 3
    %p362 = por %p360, %p361
    %p363 = scmp.ne.s32.totalorder %s352, %s353
    %p364 = scmp.eq.s32.totalorder %s28, 0
    %p365 = por %p363, %p364
    %p366 = scmp.ne.s32.totalorder %s352, %s353
    %p367 = scmp.eq.s32.totalorder %s29, 3
    %p368 = por %p366, %p367
    %p370 = scmp.ne.s32.totalorder %s353, %s369
    %p371 = scmp.eq.s32.totalorder %s29, 0
    %p372 = por %p370, %p371
    %s373 = ssub.s32 %s30, %s42
    %s374 = ssub.s32 %s31, %s38
    %s375 = sor.u32 %s373, %s374
    %p376 = scmp.eq.s32.totalorder %s375, 0
    %s378 = sadd.s32 %s377, 1
    %s379 = scalar_select %p376, %s377, %s378
    %p382 = pneg %p376
    %p383 = scmp.eq.s32.totalorder %s23, 3
    %p384 = por %p382, %p383
    %p385 = scmp.ne.s32.totalorder %s377, %s380
    %p386 = scmp.eq.s32.totalorder %s23, 0
    %p387 = por %p385, %p386
    %p388 = scmp.ne.s32.totalorder %s377, %s380
    %p389 = scmp.eq.s32.totalorder %s28, 3
    %p390 = por %p388, %p389
    %p391 = scmp.ne.s32.totalorder %s380, %s381
    %p392 = scmp.eq.s32.totalorder %s28, 0
    %p393 = por %p391, %p392
    %p394 = scmp.ne.s32.totalorder %s380, %s381
    %p395 = scmp.eq.s32.totalorder %s29, 3
    %p396 = por %p394, %p395
    %p398 = scmp.ne.s32.totalorder %s381, %s397
    %p399 = scmp.eq.s32.totalorder %s29, 0
    %p400 = por %p398, %p399
    %s401 = ssub.s32 %s30, %s42
    %p402 = scmp.eq.s32.totalorder %s401, 0
    %s404 = sadd.s32 %s403, 1
    %s405 = scalar_select %p402, %s403, %s404
    %p408 = pneg %p402
    %p409 = scmp.eq.s32.totalorder %s23, 3
    %p410 = por %p408, %p409
    %p411 = scmp.ne.s32.totalorder %s403, %s406
    %p412 = scmp.eq.s32.totalorder %s23, 0
    %p413 = por %p411, %p412
    %p414 = scmp.ne.s32.totalorder %s403, %s406
    %p415 = scmp.eq.s32.totalorder %s28, 3
    %p416 = por %p414, %p415
    %p417 = scmp.ne.s32.totalorder %s406, %s407
    %p418 = scmp.eq.s32.totalorder %s28, 0
    %p419 = por %p417, %p418
    %p420 = scmp.ne.s32.totalorder %s406, %s407
    %p421 = scmp.eq.s32.totalorder %s29, 3
    %p422 = por %p420, %p421
    %p424 = scmp.ne.s32.totalorder %s407, %s423
    %p425 = scmp.eq.s32.totalorder %s29, 0
    %p426 = por %p424, %p425
    %p427 = scmp.le.s32.totalorder 1, %s23
    %p428 = scmp.lt.s32.totalorder %s23, 5
    %p429 = pnand %p427, %p428
    %p430 = pneg %p429
    // Predicated region
    $region9: #{decoder_decode.1} parent=5 // pred_check
      _
    $region10: #{decoder_decode.1} parent=5 // pred_check_branch
      %432 = sbr.rel (%p429) target = $region12
    $region11: #{decoder_decode.1} parent=5 // pred_region
      %s433 = ssub.s32 %s23, 1
      // Predicated region
      $region13: #{decoder_decode.1} parent=11 // pred_check
        %p434 = pneg %p82
      $region14: #{decoder_decode.1} parent=11 // pred_check_branch
        %436 = sbr.rel (%p434) target = $region16
      $region15: #{decoder_decode.1} parent=11 // pred_region
        _
      $region16: #{decoder_decode.1} parent=11 // pred_fallthru
        _
      // Predicated region
      $region17: #{decoder_decode.1} parent=11 // pred_check
        %p437 = pneg %p103
      $region18: #{decoder_decode.1} parent=11 // pred_check_branch
        %439 = sbr.rel (%p437) target = $region20
      $region19: #{decoder_decode.1} parent=11 // pred_region
        _
      $region20: #{decoder_decode.1} parent=11 // pred_fallthru
        _
      // Predicated region
      $region21: #{decoder_decode.1} parent=11 // pred_check
        %p440 = pneg %p124
      $region22: #{decoder_decode.1} parent=11 // pred_check_branch
        %442 = sbr.rel (%p440) target = $region24
      $region23: #{decoder_decode.1} parent=11 // pred_region
        _
      $region24: #{decoder_decode.1} parent=11 // pred_fallthru
        _
      // Predicated region
      $region25: #{decoder_decode.1} parent=11 // pred_check
        %p443 = pneg %p145
      $region26: #{decoder_decode.1} parent=11 // pred_check_branch
        %445 = sbr.rel (%p443) target = $region28
      $region27: #{decoder_decode.1} parent=11 // pred_region
        _
      $region28: #{decoder_decode.1} parent=11 // pred_fallthru
        _
      // Predicated region
      $region29: #{decoder_decode.1} parent=11 // pred_check
        %p446 = pneg %p166
      $region30: #{decoder_decode.1} parent=11 // pred_check_branch
        %448 = sbr.rel (%p446) target = $region32
      $region31: #{decoder_decode.1} parent=11 // pred_region
        _
      $region32: #{decoder_decode.1} parent=11 // pred_fallthru
        _
      // Predicated region
      $region33: #{decoder_decode.1} parent=11 // pred_check
        %p449 = pneg %p187
      $region34: #{decoder_decode.1} parent=11 // pred_check_branch
        %451 = sbr.rel (%p449) target = $region36
      $region35: #{decoder_decode.1} parent=11 // pred_region
        _
      $region36: #{decoder_decode.1} parent=11 // pred_fallthru
        _
      // Predicated region
      $region37: #{decoder_decode.1} parent=11 // pred_check
        %p452 = pneg %p208
      $region38: #{decoder_decode.1} parent=11 // pred_check_branch
        %454 = sbr.rel (%p452) target = $region40
      $region39: #{decoder_decode.1} parent=11 // pred_region
        _
      $region40: #{decoder_decode.1} parent=11 // pred_fallthru
        _
      // Predicated region
      $region41: #{decoder_decode.1} parent=11 // pred_check
        %p455 = pneg %p229
      $region42: #{decoder_decode.1} parent=11 // pred_check_branch
        %457 = sbr.rel (%p455) target = $region44
      $region43: #{decoder_decode.1} parent=11 // pred_region
        _
      $region44: #{decoder_decode.1} parent=11 // pred_fallthru
        _
      // Predicated region
      $region45: #{decoder_decode.1} parent=11 // pred_check
        %p458 = pneg %p250
      $region46: #{decoder_decode.1} parent=11 // pred_check_branch
        %460 = sbr.rel (%p458) target = $region48
      $region47: #{decoder_decode.1} parent=11 // pred_region
        _
      $region48: #{decoder_decode.1} parent=11 // pred_fallthru
        _
      // Predicated region
      $region49: #{decoder_decode.1} parent=11 // pred_check
        %p461 = pneg %p271
      $region50: #{decoder_decode.1} parent=11 // pred_check_branch
        %463 = sbr.rel (%p461) target = $region52
      $region51: #{decoder_decode.1} parent=11 // pred_region
        _
      $region52: #{decoder_decode.1} parent=11 // pred_fallthru
        _
      // Predicated region
      $region53: #{decoder_decode.1} parent=11 // pred_check
        %p464 = pneg %p292
      $region54: #{decoder_decode.1} parent=11 // pred_check_branch
        %466 = sbr.rel (%p464) target = $region56
      $region55: #{decoder_decode.1} parent=11 // pred_region
        _
      $region56: #{decoder_decode.1} parent=11 // pred_fallthru
        _
      // Predicated region
      $region57: #{decoder_decode.1} parent=11 // pred_check
        %p467 = pneg %p313
      $region58: #{decoder_decode.1} parent=11 // pred_check_branch
        %469 = sbr.rel (%p467) target = $region60
      $region59: #{decoder_decode.1} parent=11 // pred_region
        _
      $region60: #{decoder_decode.1} parent=11 // pred_fallthru
        _
      // Predicated region
      $region61: #{decoder_decode.1} parent=11 // pred_check
        %p470 = pneg %p339
      $region62: #{decoder_decode.1} parent=11 // pred_check_branch
        %472 = sbr.rel (%p470) target = $region64
      $region63: #{decoder_decode.1} parent=11 // pred_region
        %p473 = scmp.lt.s32.totalorder %s33, 0
        %s474 = scalar_select %p473, %s33, 0
        %s475 = smul.addr %s474, 4
        %s476 = scalar_lea.vmem %s13, %s475
      $region64: #{decoder_decode.1} parent=11 // pred_fallthru
        _
      // Predicated region
      $region65: #{decoder_decode.1} parent=11 // pred_check
        %p477 = pneg %p365
      $region66: #{decoder_decode.1} parent=11 // pred_check_branch
        %479 = sbr.rel (%p477) target = $region68
      $region67: #{decoder_decode.1} parent=11 // pred_region
        %p480 = scmp.lt.s32.totalorder %s33, 0
        %s481 = scalar_select %p480, %s33, 0
        %s482 = scalar_lea.vmem %s14, %s481
      $region68: #{decoder_decode.1} parent=11 // pred_fallthru
        _
    $region12: #{decoder_decode.1} parent=5 // pred_fallthru
      _
    %p483 = scmp.lt.s32.totalorder %s23, 4
    // Predicated region
    $region69: #{decoder_decode.1} parent=5 // pred_check
      %p484 = pneg %p483
    $region70: #{decoder_decode.1} parent=5 // pred_check_branch
      %486 = sbr.rel (%p484) target = $region72
    $region71: #{decoder_decode.1} parent=5 // pred_region
      // Predicated region
      $region73: #{decoder_decode.1} parent=71 // pred_check
        %p487 = pneg %p55
      $region74: #{decoder_decode.1} parent=71 // pred_check_branch
        %489 = sbr.rel (%p487) target = $region76
      $region75: #{decoder_decode.1} parent=71 // pred_region
        %p490 = scmp.lt.s32.totalorder %s30, 3
        %s491 = scalar_select %p490, %s30, 3
        %s492 = smul.addr %s491, 2
        %s493 = smul.addr %s492, 4
        %s494 = scalar_lea.vmem %s0, %s493
      $region76: #{decoder_decode.1} parent=71 // pred_fallthru
        _
    $region72: #{decoder_decode.1} parent=5 // pred_fallthru
      _
    %p495 = scmp.le.s32.totalorder 1, %s23
    %p496 = scmp.lt.s32.totalorder %s23, 5
    %p497 = pnand %p495, %p496
    %p498 = pneg %p497
    // Predicated region
    $region77: #{decoder_decode.1} parent=5 // pred_check
      _
    $region78: #{decoder_decode.1} parent=5 // pred_check_branch
      %500 = sbr.rel (%p497) target = $region80
    $region79: #{decoder_decode.1} parent=5 // pred_region
      %s501 = ssub.s32 %s23, 1
      %p502 = scmp.lt.s32.totalorder %s32, 3
      %s503 = scalar_select %p502, %s32, 3
      %s504 = smul.addr %s503, 2
      %s505 = smul.addr %s504, 4
      %s506 = scalar_lea.vmem %s0, %s505
      %p507 = pneg %p61
      %p508 = pneg %p58
      %p509 = pneg %p82
      %p510 = pneg %p79
      %p511 = pneg %p103
      %p512 = pneg %p100
      %p513 = pneg %p124
      %p514 = pneg %p121
      %p515 = pneg %p145
      %p516 = pneg %p142
      %p517 = pneg %p166
      %p518 = pneg %p163
      %p519 = pneg %p187
      %p520 = pneg %p184
      %p521 = pneg %p208
      %p522 = pneg %p205
      %p523 = pneg %p229
      %p524 = pneg %p226
      %p525 = pneg %p250
      %p526 = pneg %p247
      %p527 = pneg %p271
      %p528 = pneg %p268
      %p529 = pneg %p292
      %p530 = pneg %p289
      %p531 = pneg %p313
      %p532 = pneg %p310
      %p533 = scmp.lt.s32.totalorder %s33, 0
      %s534 = scalar_select %p533, %s33, 0
      %s535 = smul.addr %s534, 4
      %s536 = scalar_lea.vmem %s13, %s535
      %p537 = pneg %p339
      %p538 = pneg %p336
      %p539 = scmp.lt.s32.totalorder %s33, 0
      %s540 = scalar_select %p539, %s33, 0
      %s541 = scalar_lea.vmem %s14, %s540
      %p542 = pneg %p365
      %p543 = pneg %p362
      %p544 = pneg %p393
      %p545 = pneg %p390
      %p546 = scmp.lt.s32.totalorder %s32, 3
      %s547 = scalar_select %p546, %s32, 3
      %p548 = scmp.lt.s32.totalorder %s33, 0
      %s549 = scalar_select %p548, %s33, 0
      %s550 = smul.addr %s547, 2
      %s551 = sadd.s32 %s549, %s550
      %s552 = smul.addr %s551, 8
      %s553 = scalar_lea.vmem %s15, %s552
      %p554 = pneg %p419
      %p555 = pneg %p416
      %p556 = scmp.lt.s32.totalorder %s32, 3
      %s557 = scalar_select %p556, %s32, 3
      %s558 = smul.addr %s557, 2
      %s559 = smul.addr %s558, 8
      %s560 = scalar_lea.vmem %s16, %s559
      %p561 = scmp.lt.s32.totalorder %s32, 3
      %s562 = scalar_select %p561, %s32, 3
      %s563 = smul.addr %s562, 2
      %s564 = smul.addr %s563, 4
      %s565 = scalar_lea.vmem %s0, %s564
      %p566 = scmp.lt.s32.totalorder %s33, 0
      %s567 = scalar_select %p566, %s33, 0
      %s568 = smul.addr %s567, 4
      %s569 = scalar_lea.vmem %s13, %s568
      %p570 = scmp.lt.s32.totalorder %s33, 0
      %s571 = scalar_select %p570, %s33, 0
      %s572 = scalar_lea.vmem %s14, %s571
      %p573 = scmp.lt.s32.totalorder %s32, 3
      %s574 = scalar_select %p573, %s32, 3
      %p575 = scmp.lt.s32.totalorder %s33, 0
      %s576 = scalar_select %p575, %s33, 0
      %s577 = smul.addr %s574, 2
      %s578 = sadd.s32 %s576, %s577
      %s579 = smul.addr %s578, 8
      %s580 = scalar_lea.vmem %s15, %s579
      %p581 = scmp.lt.s32.totalorder %s32, 3
      %s582 = scalar_select %p581, %s32, 3
      %s583 = smul.addr %s582, 2
      %s584 = smul.addr %s583, 8
      %s585 = scalar_lea.vmem %s16, %s584
      %p587 = scmp.eq.s32.totalorder %s33, 0
      // Predicated region
      $region81: #{decoder_decode.1} parent=79 // pred_check
        %p588 = pneg %p587
      $region82: #{decoder_decode.1} parent=79 // pred_check_branch
        %590 = sbr.rel (%p588) target = $region84
      $region83: #{decoder_decode.1} parent=79 // pred_region
        %p591 = scmp.eq.s32.totalorder %s32, 0
        // Predicated region
        $region85: #{decoder_decode.1} parent=83 // pred_check
          %p592 = pneg %p591
        $region86: #{decoder_decode.1} parent=83 // pred_check_branch
          %594 = sbr.rel (%p592) target = $region88
        $region87: #{decoder_decode.1} parent=83 // pred_region
          %v595 = vld [vmem:[%s1] sm:$0xff]
          %v596 = vld [vmem:[%s1 + $0x8] sm:$0xff]
          %vm597 = vcmask 261120
          %598 = vst.msk [vmem:[#allocation2] sm:$0xff] %vm597, %v595
          %599 = vst.msk [vmem:[#allocation2 + $0x8] sm:$0xff] %vm597, %v596
        $region88: #{decoder_decode.1} parent=83 // pred_fallthru
          _
        %v600 = vld [vmem:[%s565] sm:$0xf]
        %v601 = vld [vmem:[%s565 + $0x4] sm:$0xf]
        %v602 = vld [vmem:[#allocation2] sm:$0xff]
        %v603 = vld [vmem:[#allocation2 + $0x8] sm:$0xff]
        %v604 = vpack.c.bf16 %v603, %v602
        %v605 = vld [vmem:[%s2] sm:$0xf]
        %v606 = vld [vmem:[%s2 + $0x4] sm:$0xf]
        %v607 = vld [vmem:[%s2 + $0x8] sm:$0xf]
        %v608 = vld [vmem:[%s2 + $0xc] sm:$0xf]
        %v609 = vld [vmem:[%s2 + $0x10] sm:$0xf]
        %v610 = vld [vmem:[%s2 + $0x14] sm:$0xf]
        %v611 = vld [vmem:[%s2 + $0x18] sm:$0xf]
        %v612 = vld [vmem:[%s2 + $0x1c] sm:$0xf]
        %v613 = vld [vmem:[%s2 + $0x20] sm:$0xf]
        %v614 = vld [vmem:[%s2 + $0x24] sm:$0xf]
        %v615 = vld [vmem:[%s2 + $0x28] sm:$0xf]
        %v616 = vld [vmem:[%s2 + $0x2c] sm:$0xf]
        %v617 = vld [vmem:[%s2 + $0x30] sm:$0xf]
        %v618 = vld [vmem:[%s2 + $0x34] sm:$0xf]
        %v619 = vld [vmem:[%s2 + $0x38] sm:$0xf]
        %v620 = vld [vmem:[%s2 + $0x3c] sm:$0xf]
        %v621 = vld [vmem:[%s4] sm:$0xf]
        %v622 = vld [vmem:[%s4 + $0x4] sm:$0xf]
        %v623 = vld [vmem:[%s4 + $0x8] sm:$0xf]
        %v624 = vld [vmem:[%s4 + $0xc] sm:$0xf]
        %v629 = vunpack.c.l.b16 %v621
        %v630 = vunpack.c.l.b16 %v622
        %v631 = vunpack.c.l.b16 %v623
        %v632 = vunpack.c.l.b16 %v624
        %v633 = vpack.c.b16 %v630, %v629
        %v634 = vpack.c.b16 %v632, %v631
        %vm637 = vcmask 261120
        %v639 = vsel %vm637, %v604, 0
        %641 = vmatprep.subr.bf16.mxu0 0
        %642 = vmatpush1.bf16.msra.mxu0 %v633
        %643 = vmatprep.subr.bf16.mxu0 0
        %644 = vmatpush1.bf16.msra.mxu0 %v634
        %645 = vmatprep.subr.bf16.mxu0 0
        %646 = vmatpush1.bf16.msra.mxu0 0
        %647 = vmatprep.subr.bf16.mxu0 0
        %648 = vmatpush1.bf16.msra.mxu0 0
        %649 = vmatprep.subr.bf16.mxu0 0
        %650 = vmatpush1.bf16.msra.mxu0 0
        %651 = vmatprep.subr.bf16.mxu0 0
        %652 = vmatpush1.bf16.msra.mxu0 0
        %653 = vmatprep.subr.bf16.mxu0 0
        %654 = vmatpush1.bf16.msra.mxu0 0
        %655 = vmatprep.subr.bf16.mxu0 0
        %656 = vmatpush1.bf16.msra.mxu0 0
        %657 = vmatprep.subr.bf16.mxu0 0
        %658 = vmatpush1.bf16.msra.mxu0 0
        %659 = vmatprep.subr.bf16.mxu0 0
        %660 = vmatpush1.bf16.msra.mxu0 0
        %661 = vmatprep.subr.bf16.mxu0 0
        %662 = vmatpush1.bf16.msra.mxu0 0
        %663 = vmatprep.subr.bf16.mxu0 0
        %664 = vmatpush1.bf16.msra.mxu0 0
        %665 = vmatprep.subr.bf16.mxu0 0
        %666 = vmatpush1.bf16.msra.mxu0 0
        %667 = vmatprep.subr.bf16.mxu0 0
        %668 = vmatpush1.bf16.msra.mxu0 0
        %669 = vmatprep.subr.bf16.mxu0 0
        %670 = vmatpush1.bf16.msra.mxu0 0
        %671 = vmatprep.subr.bf16.mxu0 0
        %672 = vmatpush1.bf16.msra.mxu0 0
        %673 = vmatprep.mubr.bf16.mxu0 0
        %674 = vmatmul.mubr.bf16.gmra.mrb[0].mxu0 %v639
        %v675 = vpop.f32.mrb[0].mxu0
        %v676 = vadd.f32 0.0, %v675
        %v677 = vpop.f32.mrb[0].mxu0
        %v678 = vpop.f32.mrb[0].mxu0
        %v679 = vadd.f32 0.0, %v678
        %v680 = vpop.f32.mrb[0].mxu0
        %681 = vdwg.mxu0
        %v682 = vld [vmem:[%s3] sm:$0xf]
        %v683 = vld [vmem:[%s3 + $0x4] sm:$0xf]
        %v684 = vld [vmem:[%s3 + $0x8] sm:$0xf]
        %v685 = vld [vmem:[%s3 + $0xc] sm:$0xf]
        %v686 = vld [vmem:[%s3 + $0x10] sm:$0xf]
        %v687 = vld [vmem:[%s3 + $0x14] sm:$0xf]
        %v688 = vld [vmem:[%s3 + $0x18] sm:$0xf]
        %v689 = vld [vmem:[%s3 + $0x1c] sm:$0xf]
        %v690 = vld [vmem:[%s3 + $0x20] sm:$0xf]
        %v691 = vld [vmem:[%s3 + $0x24] sm:$0xf]
        %v692 = vld [vmem:[%s3 + $0x28] sm:$0xf]
        %v693 = vld [vmem:[%s3 + $0x2c] sm:$0xf]
        %v694 = vld [vmem:[%s3 + $0x30] sm:$0xf]
        %v695 = vld [vmem:[%s3 + $0x34] sm:$0xf]
        %v696 = vld [vmem:[%s3 + $0x38] sm:$0xf]
        %v697 = vld [vmem:[%s3 + $0x3c] sm:$0xf]
        %v698 = vld [vmem:[%s5] sm:$0xf]
        %v699 = vld [vmem:[%s5 + $0x4] sm:$0xf]
        %v700 = vld [vmem:[%s5 + $0x8] sm:$0xf]
        %v701 = vld [vmem:[%s5 + $0xc] sm:$0xf]
        %v718 = vunpack.c.l.b16 %v682
        %v719 = vunpack.c.l.b16 %v683
        %v720 = vunpack.c.l.b16 %v684
        %v721 = vunpack.c.l.b16 %v685
        %v722 = vunpack.c.l.b16 %v686
        %v723 = vunpack.c.l.b16 %v687
        %v724 = vunpack.c.l.b16 %v688
        %v725 = vunpack.c.l.b16 %v689
        %v726 = vunpack.c.l.b16 %v690
        %v727 = vunpack.c.l.b16 %v691
        %v728 = vunpack.c.l.b16 %v692
        %v729 = vunpack.c.l.b16 %v693
        %v730 = vunpack.c.l.b16 %v694
        %v731 = vunpack.c.l.b16 %v695
        %v732 = vunpack.c.l.b16 %v696
        %v733 = vunpack.c.l.b16 %v697
        %v734 = vpack.c.b16 %v719, %v718
        %v735 = vpack.c.b16 %v721, %v720
        %v736 = vpack.c.b16 %v723, %v722
        %v737 = vpack.c.b16 %v725, %v724
        %v738 = vpack.c.b16 %v727, %v726
        %v739 = vpack.c.b16 %v729, %v728
        %v740 = vpack.c.b16 %v731, %v730
        %v741 = vpack.c.b16 %v733, %v732
        %v746 = vunpack.c.l.b16 %v698
        %v747 = vunpack.c.l.b16 %v699
        %v748 = vunpack.c.l.b16 %v700
        %v749 = vunpack.c.l.b16 %v701
        %v750 = vpack.c.b16 %v747, %v746
        %v751 = vpack.c.b16 %v749, %v748
        %v755 = vsel %vm637, %v734, 0
        %v758 = vsel %vm637, %v735, 0
        %v761 = vsel %vm637, %v736, 0
        %v764 = vsel %vm637, %v737, 0
        %v767 = vsel %vm637, %v738, 0
        %v770 = vsel %vm637, %v739, 0
        %v773 = vsel %vm637, %v740, 0
        %v776 = vsel %vm637, %v741, 0
        %778 = vmatprep.subr.bf16.mxu0 0
        %779 = vmatpush1.bf16.msra.mxu0 %v750
        %780 = vmatprep.subr.bf16.mxu0 0
        %781 = vmatpush1.bf16.msra.mxu0 %v751
        %782 = vmatprep.subr.bf16.mxu0 0
        %783 = vmatpush1.bf16.msra.mxu0 0
        %784 = vmatprep.subr.bf16.mxu0 0
        %785 = vmatpush1.bf16.msra.mxu0 0
        %786 = vmatprep.subr.bf16.mxu0 0
        %787 = vmatpush1.bf16.msra.mxu0 0
        %788 = vmatprep.subr.bf16.mxu0 0
        %789 = vmatpush1.bf16.msra.mxu0 0
        %790 = vmatprep.subr.bf16.mxu0 0
        %791 = vmatpush1.bf16.msra.mxu0 0
        %792 = vmatprep.subr.bf16.mxu0 0
        %793 = vmatpush1.bf16.msra.mxu0 0
        %794 = vmatprep.subr.bf16.mxu0 0
        %795 = vmatpush1.bf16.msra.mxu0 0
        %796 = vmatprep.subr.bf16.mxu0 0
        %797 = vmatpush1.bf16.msra.mxu0 0
        %798 = vmatprep.subr.bf16.mxu0 0
        %799 = vmatpush1.bf16.msra.mxu0 0
        %800 = vmatprep.subr.bf16.mxu0 0
        %801 = vmatpush1.bf16.msra.mxu0 0
        %802 = vmatprep.subr.bf16.mxu0 0
        %803 = vmatpush1.bf16.msra.mxu0 0
        %804 = vmatprep.subr.bf16.mxu0 0
        %805 = vmatpush1.bf16.msra.mxu0 0
        %806 = vmatprep.subr.bf16.mxu0 0
        %807 = vmatpush1.bf16.msra.mxu0 0
        %808 = vmatprep.subr.bf16.mxu0 0
        %809 = vmatpush1.bf16.msra.mxu0 0
        %810 = vmatprep.mubr.bf16.mxu0 0
        %811 = vmatmul.mubr.bf16.gmra.mrb[0].mxu0 %v755
        %v812 = vpop.f32.mrb[0].mxu0
        %v813 = vadd.f32 0.0, %v812
        %v814 = vpop.f32.mrb[0].mxu0
        %v815 = vpop.f32.mrb[0].mxu0
        %v816 = vadd.f32 0.0, %v815
        %v817 = vpop.f32.mrb[0].mxu0
        %818 = vmatprep.mubr.bf16.mxu0 0
        %819 = vmatmul.mubr.bf16.gmra.mrb[0].mxu0 %v758
        %v820 = vpop.f32.mrb[0].mxu0
        %v821 = vadd.f32 0.0, %v820
        %v822 = vpop.f32.mrb[0].mxu0
        %v823 = vpop.f32.mrb[0].mxu0
        %v824 = vadd.f32 0.0, %v823
        %v825 = vpop.f32.mrb[0].mxu0
        %826 = vmatprep.mubr.bf16.mxu0 0
        %827 = vmatmul.mubr.bf16.gmra.mrb[0].mxu0 %v761
        %v828 = vpop.f32.mrb[0].mxu0
        %v829 = vadd.f32 0.0, %v828
        %v830 = vpop.f32.mrb[0].mxu0
        %v831 = vpop.f32.mrb[0].mxu0
        %v832 = vadd.f32 0.0, %v831
        %v833 = vpop.f32.mrb[0].mxu0
        %834 = vmatprep.mubr.bf16.mxu0 0
        %835 = vmatmul.mubr.bf16.gmra.mrb[0].mxu0 %v764
        %v836 = vpop.f32.mrb[0].mxu0
        %v837 = vadd.f32 0.0, %v836
        %v838 = vpop.f32.mrb[0].mxu0
        %v839 = vpop.f32.mrb[0].mxu0
        %v840 = vadd.f32 0.0, %v839
        %v841 = vpop.f32.mrb[0].mxu0
        %842 = vmatprep.mubr.bf16.mxu0 0
        %843 = vmatmul.mubr.bf16.gmra.mrb[0].mxu0 %v767
        %v844 = vpop.f32.mrb[0].mxu0
        %v845 = vadd.f32 0.0, %v844
        %v846 = vpop.f32.mrb[0].mxu0
        %v847 = vpop.f32.mrb[0].mxu0
        %v848 = vadd.f32 0.0, %v847
        %v849 = vpop.f32.mrb[0].mxu0
        %850 = vmatprep.mubr.bf16.mxu0 0
        %851 = vmatmul.mubr.bf16.gmra.mrb[0].mxu0 %v770
        %v852 = vpop.f32.mrb[0].mxu0
        %v853 = vadd.f32 0.0, %v852
        %v854 = vpop.f32.mrb[0].mxu0
        %v855 = vpop.f32.mrb[0].mxu0
        %v856 = vadd.f32 0.0, %v855
        %v857 = vpop.f32.mrb[0].mxu0
        %858 = vmatprep.mubr.bf16.mxu0 0
        %859 = vmatmul.mubr.bf16.gmra.mrb[0].mxu0 %v773
        %v860 = vpop.f32.mrb[0].mxu0
        %v861 = vadd.f32 0.0, %v860
        %v862 = vpop.f32.mrb[0].mxu0
        %v863 = vpop.f32.mrb[0].mxu0
        %v864 = vadd.f32 0.0, %v863
        %v865 = vpop.f32.mrb[0].mxu0
        %866 = vmatprep.mubr.bf16.mxu0 0
        %867 = vmatmul.mubr.bf16.gmra.mrb[0].mxu0 %v776
        %v868 = vpop.f32.mrb[0].mxu0
        %v869 = vadd.f32 0.0, %v868
        %v870 = vpop.f32.mrb[0].mxu0
        %v871 = vpop.f32.mrb[0].mxu0
        %v872 = vadd.f32 0.0, %v871
        %v873 = vpop.f32.mrb[0].mxu0
        %874 = vdwg.mxu0
        %v877 = vcombine.high %v676, %v676
        %v879 = vunpack.c.l.s4 1966171168
        %v880 = vunpack.c.0.s8 %v879
        %v881 = vlaneseq
        %v882 = vshrl.u32 %v881, 7
        %v883 = vsub.s32 %v880, %v882
        %v884 = vrot.slane %v676, %v883
        %v886 = vunpack.c.l.s4 1966171168
        %v887 = vunpack.c.0.s8 %v886
        %v888 = vlaneseq
        %v889 = vshrl.u32 %v888, 7
        %v890 = vsub.s32 %v887, %v889
        %v891 = vrot.slane %v877, %v890
        %v892 = vcombine.high %v884, %v884
        %v893 = vcombine.high %v891, %v891
        %v895 = vunpack.c.l.s4 1966171168
        %v896 = vunpack.c.0.s8 %v895
        %v897 = vlaneseq
        %v898 = vshrl.u32 %v897, 7
        %v899 = vsub.s32 %v896, %v898
        %v900 = vrot.slane %v884, %v899
        %v902 = vunpack.c.l.s4 1966171168
        %v903 = vunpack.c.0.s8 %v902
        %v904 = vlaneseq
        %v905 = vshrl.u32 %v904, 7
        %v906 = vsub.s32 %v903, %v905
        %v907 = vrot.slane %v891, %v906
        %v909 = vunpack.c.l.s4 1966171168
        %v910 = vunpack.c.0.s8 %v909
        %v911 = vlaneseq
        %v912 = vshrl.u32 %v911, 7
        %v913 = vsub.s32 %v910, %v912
        %v914 = vrot.slane %v892, %v913
        %v916 = vunpack.c.l.s4 1966171168
        %v917 = vunpack.c.0.s8 %v916
        %v918 = vlaneseq
        %v919 = vshrl.u32 %v918, 7
        %v920 = vsub.s32 %v917, %v919
        %v921 = vrot.slane %v893, %v920
        %v922 = vcombine.high %v900, %v900
        %v923 = vcombine.high %v907, %v907
        %v924 = vcombine.high %v914, %v914
        %v925 = vcombine.high %v921, %v921
        %v926 = vcombine.high %v679, %v679
        %v928 = vunpack.c.l.s4 1966171168
        %v929 = vunpack.c.0.s8 %v928
        %v930 = vlaneseq
        %v931 = vshrl.u32 %v930, 7
        %v932 = vsub.s32 %v929, %v931
        %v933 = vrot.slane %v679, %v932
        %v935 = vunpack.c.l.s4 1966171168
        %v936 = vunpack.c.0.s8 %v935
        %v937 = vlaneseq
        %v938 = vshrl.u32 %v937, 7
        %v939 = vsub.s32 %v936, %v938
        %v940 = vrot.slane %v926, %v939
        %v941 = vcombine.high %v933, %v933
        %v942 = vcombine.high %v940, %v940
        %v944 = vunpack.c.l.s4 1966171168
        %v945 = vunpack.c.0.s8 %v944
        %v946 = vlaneseq
        %v947 = vshrl.u32 %v946, 7
        %v948 = vsub.s32 %v945, %v947
        %v949 = vrot.slane %v933, %v948
        %v951 = vunpack.c.l.s4 1966171168
        %v952 = vunpack.c.0.s8 %v951
        %v953 = vlaneseq
        %v954 = vshrl.u32 %v953, 7
        %v955 = vsub.s32 %v952, %v954
        %v956 = vrot.slane %v940, %v955
        %v958 = vunpack.c.l.s4 1966171168
        %v959 = vunpack.c.0.s8 %v958
        %v960 = vlaneseq
        %v961 = vshrl.u32 %v960, 7
        %v962 = vsub.s32 %v959, %v961
        %v963 = vrot.slane %v941, %v962
        %v965 = vunpack.c.l.s4 1966171168
        %v966 = vunpack.c.0.s8 %v965
        %v967 = vlaneseq
        %v968 = vshrl.u32 %v967, 7
        %v969 = vsub.s32 %v966, %v968
        %v970 = vrot.slane %v942, %v969
        %v971 = vcombine.high %v949, %v949
        %v972 = vcombine.high %v956, %v956
        %v973 = vcombine.high %v963, %v963
        %v974 = vcombine.high %v970, %v970
        %v975 = vlaneseq
        %v976 = vshrl.u32 %v975, 7
        %v977 = vsub.s32 0, %v976
        %v978 = vrot.slane %v900, %v977
        %v979 = vlaneseq
        %v980 = vshrl.u32 %v979, 7
        %v981 = vsub.s32 0, %v980
        %v982 = vrot.slane %v914, %v981
        %v983 = vlaneseq
        %v984 = vshrl.u32 %v983, 7
        %v985 = vsub.s32 0, %v984
        %v986 = vrot.slane %v922, %v985
        %v987 = vlaneseq
        %v988 = vshrl.u32 %v987, 7
        %v989 = vsub.s32 0, %v988
        %v990 = vrot.slane %v924, %v989
        %v991 = vlaneseq
        %v992 = vshrl.u32 %v991, 7
        %v993 = vsub.s32 0, %v992
        %v994 = vrot.slane %v907, %v993
        %v995 = vlaneseq
        %v996 = vshrl.u32 %v995, 7
        %v997 = vsub.s32 0, %v996
        %v998 = vrot.slane %v921, %v997
        %v999 = vlaneseq
        %v1000 = vshrl.u32 %v999, 7
        %v1001 = vsub.s32 0, %v1000
        %v1002 = vrot.slane %v923, %v1001
        %v1003 = vlaneseq
        %v1004 = vshrl.u32 %v1003, 7
        %v1005 = vsub.s32 0, %v1004
        %v1006 = vrot.slane %v925, %v1005
        %v1007 = vlaneseq
        %v1008 = vshrl.u32 %v1007, 7
        %v1009 = vsub.s32 0, %v1008
        %v1010 = vrot.slane %v949, %v1009
        %v1011 = vlaneseq
        %v1012 = vshrl.u32 %v1011, 7
        %v1013 = vsub.s32 0, %v1012
        %v1014 = vrot.slane %v963, %v1013
        %v1015 = vlaneseq
        %v1016 = vshrl.u32 %v1015, 7
        %v1017 = vsub.s32 0, %v1016
        %v1018 = vrot.slane %v971, %v1017
        %v1019 = vlaneseq
        %v1020 = vshrl.u32 %v1019, 7
        %v1021 = vsub.s32 0, %v1020
        %v1022 = vrot.slane %v973, %v1021
        %v1023 = vlaneseq
        %v1024 = vshrl.u32 %v1023, 7
        %v1025 = vsub.s32 0, %v1024
        %v1026 = vrot.slane %v956, %v1025
        %v1027 = vlaneseq
        %v1028 = vshrl.u32 %v1027, 7
        %v1029 = vsub.s32 0, %v1028
        %v1030 = vrot.slane %v970, %v1029
        %v1031 = vlaneseq
        %v1032 = vshrl.u32 %v1031, 7
        %v1033 = vsub.s32 0, %v1032
        %v1034 = vrot.slane %v972, %v1033
        %v1035 = vlaneseq
        %v1036 = vshrl.u32 %v1035, 7
        %v1037 = vsub.s32 0, %v1036
        %v1038 = vrot.slane %v974, %v1037
        %v1055 = vadd.f32 %v978, %v813
        %v1056 = vadd.f32 %v982, %v816
        %v1057 = vadd.f32 %v986, %v821
        %v1058 = vadd.f32 %v990, %v824
        %v1059 = vadd.f32 %v994, %v829
        %v1060 = vadd.f32 %v998, %v832
        %v1061 = vadd.f32 %v1002, %v837
        %v1062 = vadd.f32 %v1006, %v840
        %v1063 = vadd.f32 %v1010, %v845
        %v1064 = vadd.f32 %v1014, %v848
        %v1065 = vadd.f32 %v1018, %v853
        %v1066 = vadd.f32 %v1022, %v856
        %v1067 = vadd.f32 %v1026, %v861
        %v1068 = vadd.f32 %v1030, %v864
        %v1069 = vadd.f32 %v1034, %v869
        %v1070 = vadd.f32 %v1038, %v872
        %v1071 = vld [vmem:[%s6] sm:$0x1]
        %v1073 = vlaneseq
        %v1074 = vshrl.u32 %v1073, 7
        %v1075 = vsub.s32 0, %v1074
        %v1076 = vrot.slane %v1071, %v1075
        %v1078 = vadd.f32 %v1055, %v1076
        %v1079 = vadd.f32 %v1056, %v1076
        %v1080 = vadd.f32 %v1057, %v1076
        %v1081 = vadd.f32 %v1058, %v1076
        %v1082 = vadd.f32 %v1059, %v1076
        %v1083 = vadd.f32 %v1060, %v1076
        %v1084 = vadd.f32 %v1061, %v1076
        %v1085 = vadd.f32 %v1062, %v1076
        %v1086 = vadd.f32 %v1063, %v1076
        %v1087 = vadd.f32 %v1064, %v1076
        %v1088 = vadd.f32 %v1065, %v1076
        %v1089 = vadd.f32 %v1066, %v1076
        %v1090 = vadd.f32 %v1067, %v1076
        %v1091 = vadd.f32 %v1068, %v1076
        %v1092 = vadd.f32 %v1069, %v1076
        %v1093 = vadd.f32 %v1070, %v1076
        %v1094 = vtanh.pop %v1078
        %v1095 = vtanh.pop %v1079
        %v1096 = vtanh.pop %v1080
        %v1097 = vtanh.pop %v1081
        %v1098 = vtanh.pop %v1082
        %v1099 = vtanh.pop %v1083
        %v1100 = vtanh.pop %v1084
        %v1101 = vtanh.pop %v1085
        %v1102 = vtanh.pop %v1086
        %v1103 = vtanh.pop %v1087
        %v1104 = vtanh.pop %v1088
        %v1105 = vtanh.pop %v1089
        %v1106 = vtanh.pop %v1090
        %v1107 = vtanh.pop %v1091
        %v1108 = vtanh.pop %v1092
        %v1109 = vtanh.pop %v1093
        %v1110 = vld [vmem:[%s7] sm:$0x1]
        %v1112 = vlaneseq
        %v1113 = vshrl.u32 %v1112, 7
        %v1114 = vsub.s32 0, %v1113
        %v1115 = vrot.slane %v1110, %v1114
        %v1117 = vmul.f32 %v1094, %v1115
        %v1118 = vmul.f32 %v1095, %v1115
        %v1119 = vmul.f32 %v1096, %v1115
        %v1120 = vmul.f32 %v1097, %v1115
        %v1121 = vmul.f32 %v1098, %v1115
        %v1122 = vmul.f32 %v1099, %v1115
        %v1123 = vmul.f32 %v1100, %v1115
        %v1124 = vmul.f32 %v1101, %v1115
        %v1125 = vmul.f32 %v1102, %v1115
        %v1126 = vmul.f32 %v1103, %v1115
        %v1127 = vmul.f32 %v1104, %v1115
        %v1128 = vmul.f32 %v1105, %v1115
        %v1129 = vmul.f32 %v1106, %v1115
        %v1130 = vmul.f32 %v1107, %v1115
        %v1131 = vmul.f32 %v1108, %v1115
        %v1132 = vmul.f32 %v1109, %v1115
        %v1133 = vsel %vm637, %v1117, 0.0
        %1134 = vadd.xlane.f32.xlu0 %v1133
        %v1135 = vpop.xlane.xlu0 %1134
        %v1136 = vsel %vm637, %v1118, 0.0
        %1137 = vadd.xlane.f32.xlu0 %v1136
        %v1138 = vpop.xlane.xlu0 %1137
        %v1139 = vsel %vm637, %v1119, 0.0
        %1140 = vadd.xlane.f32.xlu0 %v1139
        %v1141 = vpop.xlane.xlu0 %1140
        %v1142 = vsel %vm637, %v1120, 0.0
        %1143 = vadd.xlane.f32.xlu0 %v1142
        %v1144 = vpop.xlane.xlu0 %1143
        %v1145 = vsel %vm637, %v1121, 0.0
        %1146 = vadd.xlane.f32.xlu0 %v1145
        %v1147 = vpop.xlane.xlu0 %1146
        %v1148 = vsel %vm637, %v1122, 0.0
        %1149 = vadd.xlane.f32.xlu0 %v1148
        %v1150 = vpop.xlane.xlu0 %1149
        %v1151 = vsel %vm637, %v1123, 0.0
        %1152 = vadd.xlane.f32.xlu0 %v1151
        %v1153 = vpop.xlane.xlu0 %1152
        %v1154 = vsel %vm637, %v1124, 0.0
        %1155 = vadd.xlane.f32.xlu0 %v1154
        %v1156 = vpop.xlane.xlu0 %1155
        %v1157 = vsel %vm637, %v1125, 0.0
        %1158 = vadd.xlane.f32.xlu0 %v1157
        %v1159 = vpop.xlane.xlu0 %1158
        %v1160 = vsel %vm637, %v1126, 0.0
        %1161 = vadd.xlane.f32.xlu0 %v1160
        %v1162 = vpop.xlane.xlu0 %1161
        %v1163 = vsel %vm637, %v1127, 0.0
        %1164 = vadd.xlane.f32.xlu0 %v1163
        %v1165 = vpop.xlane.xlu0 %1164
        %v1166 = vsel %vm637, %v1128, 0.0
        %1167 = vadd.xlane.f32.xlu0 %v1166
        %v1168 = vpop.xlane.xlu0 %1167
        %v1169 = vsel %vm637, %v1129, 0.0
        %1170 = vadd.xlane.f32.xlu0 %v1169
        %v1171 = vpop.xlane.xlu0 %1170
        %v1172 = vsel %vm637, %v1130, 0.0
        %1173 = vadd.xlane.f32.xlu0 %v1172
        %v1174 = vpop.xlane.xlu0 %1173
        %v1175 = vsel %vm637, %v1131, 0.0
        %1176 = vadd.xlane.f32.xlu0 %v1175
        %v1177 = vpop.xlane.xlu0 %1176
        %v1178 = vsel %vm637, %v1132, 0.0
        %1179 = vadd.xlane.f32.xlu0 %v1178
        %v1180 = vpop.xlane.xlu0 %1179
        %v1197 = vlaneseq
        %v1198 = vand.u32 %v1197, 127
        %v1199 = vlaneseq
        %v1200 = vshrl.u32 %v1199, 7
        %v1201 = vsub.s32 %v1198, %v1200
        %v1202 = vrot.slane %v1135, %v1201
        %v1203 = vlaneseq
        %v1204 = vshrl.u32 %v1203, 7
        %v1205 = vsub.s32 %v1198, %v1204
        %v1206 = vrot.slane %v1138, %v1205
        %v1207 = vlaneseq
        %v1208 = vshrl.u32 %v1207, 7
        %v1209 = vsub.s32 %v1198, %v1208
        %v1210 = vrot.slane %v1141, %v1209
        %v1211 = vlaneseq
        %v1212 = vshrl.u32 %v1211, 7
        %v1213 = vsub.s32 %v1198, %v1212
        %v1214 = vrot.slane %v1144, %v1213
        %v1215 = vlaneseq
        %v1216 = vshrl.u32 %v1215, 7
        %v1217 = vsub.s32 %v1198, %v1216
        %v1218 = vrot.slane %v1147, %v1217
        %v1219 = vlaneseq
        %v1220 = vshrl.u32 %v1219, 7
        %v1221 = vsub.s32 %v1198, %v1220
        %v1222 = vrot.slane %v1150, %v1221
        %v1223 = vlaneseq
        %v1224 = vshrl.u32 %v1223, 7
        %v1225 = vsub.s32 %v1198, %v1224
        %v1226 = vrot.slane %v1153, %v1225
        %v1227 = vlaneseq
        %v1228 = vshrl.u32 %v1227, 7
        %v1229 = vsub.s32 %v1198, %v1228
        %v1230 = vrot.slane %v1156, %v1229
        %v1231 = vlaneseq
        %v1232 = vshrl.u32 %v1231, 7
        %v1233 = vsub.s32 %v1198, %v1232
        %v1234 = vrot.slane %v1159, %v1233
        %v1235 = vlaneseq
        %v1236 = vshrl.u32 %v1235, 7
        %v1237 = vsub.s32 %v1198, %v1236
        %v1238 = vrot.slane %v1162, %v1237
        %v1239 = vlaneseq
        %v1240 = vshrl.u32 %v1239, 7
        %v1241 = vsub.s32 %v1198, %v1240
        %v1242 = vrot.slane %v1165, %v1241
        %v1243 = vlaneseq
        %v1244 = vshrl.u32 %v1243, 7
        %v1245 = vsub.s32 %v1198, %v1244
        %v1246 = vrot.slane %v1168, %v1245
        %v1247 = vlaneseq
        %v1248 = vshrl.u32 %v1247, 7
        %v1249 = vsub.s32 %v1198, %v1248
        %v1250 = vrot.slane %v1171, %v1249
        %v1251 = vlaneseq
        %v1252 = vshrl.u32 %v1251, 7
        %v1253 = vsub.s32 %v1198, %v1252
        %v1254 = vrot.slane %v1174, %v1253
        %v1255 = vlaneseq
        %v1256 = vshrl.u32 %v1255, 7
        %v1257 = vsub.s32 %v1198, %v1256
        %v1258 = vrot.slane %v1177, %v1257
        %v1259 = vlaneseq
        %v1260 = vshrl.u32 %v1259, 7
        %v1261 = vsub.s32 %v1198, %v1260
        %v1262 = vrot.slane %v1180, %v1261
        %vm1263 = vcmask 1041409
        %v1264 = vsel %vm1263, %v1206, %v1202
        %vm1265 = vcmask 1042434
        %v1266 = vsel %vm1265, %v1210, %v1264
        %vm1267 = vcmask 1043459
        %v1268 = vsel %vm1267, %v1214, %v1266
        %vm1269 = vcmask 1044484
        %v1270 = vsel %vm1269, %v1218, %v1268
        %vm1271 = vcmask 1045509
        %v1272 = vsel %vm1271, %v1222, %v1270
        %vm1273 = vcmask 1046534
        %v1274 = vsel %vm1273, %v1226, %v1272
        %vm1275 = vcmask 1047559
        %v1276 = vsel %vm1275, %v1230, %v1274
        %v1277 = vsel %vm1263, %v1238, %v1234
        %v1278 = vsel %vm1265, %v1242, %v1277
        %v1279 = vsel %vm1267, %v1246, %v1278
        %v1280 = vsel %vm1269, %v1250, %v1279
        %v1281 = vsel %vm1271, %v1254, %v1280
        %v1282 = vsel %vm1273, %v1258, %v1281
        %v1283 = vsel %vm1275, %v1262, %v1282
        %vm1286 = vcmask 64512
        %v1287 = vsel %vm1286, %v1276, -inf
        %1288 = vmax.xlane.f32.xlu0 %v1287
        %v1289 = vpop.xlane.xlu0 %1288
        %v1290 = vsel %vm1286, %v1283, -inf
        %1291 = vmax.xlane.f32.xlu0 %v1290
        %v1292 = vpop.xlane.xlu0 %1291
        %v1295 = vlaneseq
        %v1296 = vshrl.u32 %v1295, 7
        %v1297 = vsub.s32 0, %v1296
        %v1298 = vrot.slane %v1289, %v1297
        %v1299 = vlaneseq
        %v1300 = vshrl.u32 %v1299, 7
        %v1301 = vsub.s32 1, %v1300
        %v1302 = vrot.slane %v1289, %v1301
        %v1303 = vlaneseq
        %v1304 = vshrl.u32 %v1303, 7
        %v1305 = vsub.s32 2, %v1304
        %v1306 = vrot.slane %v1289, %v1305
        %v1307 = vlaneseq
        %v1308 = vshrl.u32 %v1307, 7
        %v1309 = vsub.s32 3, %v1308
        %v1310 = vrot.slane %v1289, %v1309
        %v1311 = vlaneseq
        %v1312 = vshrl.u32 %v1311, 7
        %v1313 = vsub.s32 4, %v1312
        %v1314 = vrot.slane %v1289, %v1313
        %v1315 = vlaneseq
        %v1316 = vshrl.u32 %v1315, 7
        %v1317 = vsub.s32 5, %v1316
        %v1318 = vrot.slane %v1289, %v1317
        %v1319 = vlaneseq
        %v1320 = vshrl.u32 %v1319, 7
        %v1321 = vsub.s32 6, %v1320
        %v1322 = vrot.slane %v1289, %v1321
        %v1323 = vlaneseq
        %v1324 = vshrl.u32 %v1323, 7
        %v1325 = vsub.s32 7, %v1324
        %v1326 = vrot.slane %v1289, %v1325
        %v1327 = vlaneseq
        %v1328 = vshrl.u32 %v1327, 7
        %v1329 = vsub.s32 0, %v1328
        %v1330 = vrot.slane %v1292, %v1329
        %v1331 = vlaneseq
        %v1332 = vshrl.u32 %v1331, 7
        %v1333 = vsub.s32 1, %v1332
        %v1334 = vrot.slane %v1292, %v1333
        %v1335 = vlaneseq
        %v1336 = vshrl.u32 %v1335, 7
        %v1337 = vsub.s32 2, %v1336
        %v1338 = vrot.slane %v1292, %v1337
        %v1339 = vlaneseq
        %v1340 = vshrl.u32 %v1339, 7
        %v1341 = vsub.s32 3, %v1340
        %v1342 = vrot.slane %v1292, %v1341
        %v1343 = vlaneseq
        %v1344 = vshrl.u32 %v1343, 7
        %v1345 = vsub.s32 4, %v1344
        %v1346 = vrot.slane %v1292, %v1345
        %v1347 = vlaneseq
        %v1348 = vshrl.u32 %v1347, 7
        %v1349 = vsub.s32 5, %v1348
        %v1350 = vrot.slane %v1292, %v1349
        %v1351 = vlaneseq
        %v1352 = vshrl.u32 %v1351, 7
        %v1353 = vsub.s32 6, %v1352
        %v1354 = vrot.slane %v1292, %v1353
        %v1355 = vlaneseq
        %v1356 = vshrl.u32 %v1355, 7
        %v1357 = vsub.s32 7, %v1356
        %v1358 = vrot.slane %v1292, %v1357
        %v1375 = vsub.f32 %v1135, %v1298
        %v1376 = vsub.f32 %v1138, %v1302
        %v1377 = vsub.f32 %v1141, %v1306
        %v1378 = vsub.f32 %v1144, %v1310
        %v1379 = vsub.f32 %v1147, %v1314
        %v1380 = vsub.f32 %v1150, %v1318
        %v1381 = vsub.f32 %v1153, %v1322
        %v1382 = vsub.f32 %v1156, %v1326
        %v1383 = vsub.f32 %v1159, %v1330
        %v1384 = vsub.f32 %v1162, %v1334
        %v1385 = vsub.f32 %v1165, %v1338
        %v1386 = vsub.f32 %v1168, %v1342
        %v1387 = vsub.f32 %v1171, %v1346
        %v1388 = vsub.f32 %v1174, %v1350
        %v1389 = vsub.f32 %v1177, %v1354
        %v1390 = vsub.f32 %v1180, %v1358
        %v1391 = vmul.f32 %v1375, 1.442695
        %v1392 = vpow.pop %v1391
        %v1393 = vmul.f32 %v1376, 1.442695
        %v1394 = vpow.pop %v1393
        %v1395 = vmul.f32 %v1377, 1.442695
        %v1396 = vpow.pop %v1395
        %v1397 = vmul.f32 %v1378, 1.442695
        %v1398 = vpow.pop %v1397
        %v1399 = vmul.f32 %v1379, 1.442695
        %v1400 = vpow.pop %v1399
        %v1401 = vmul.f32 %v1380, 1.442695
        %v1402 = vpow.pop %v1401
        %v1403 = vmul.f32 %v1381, 1.442695
        %v1404 = vpow.pop %v1403
        %v1405 = vmul.f32 %v1382, 1.442695
        %v1406 = vpow.pop %v1405
        %v1407 = vmul.f32 %v1383, 1.442695
        %v1408 = vpow.pop %v1407
        %v1409 = vmul.f32 %v1384, 1.442695
        %v1410 = vpow.pop %v1409
        %v1411 = vmul.f32 %v1385, 1.442695
        %v1412 = vpow.pop %v1411
        %v1413 = vmul.f32 %v1386, 1.442695
        %v1414 = vpow.pop %v1413
        %v1415 = vmul.f32 %v1387, 1.442695
        %v1416 = vpow.pop %v1415
        %v1417 = vmul.f32 %v1388, 1.442695
        %v1418 = vpow.pop %v1417
        %v1419 = vmul.f32 %v1389, 1.442695
        %v1420 = vpow.pop %v1419
        %v1421 = vmul.f32 %v1390, 1.442695
        %v1422 = vpow.pop %v1421
        %1439 = vset.pattern.permute.xlu0 0
        %1440 = vperm.xlu0 %1439, %v1392
        %v1441 = vpop.permute.xlu0 %1440
        %1442 = vset.pattern.permute.xlu0 0
        %1443 = vperm.xlu0 %1442, %v1394
        %v1444 = vpop.permute.xlu0 %1443
        %1445 = vset.pattern.permute.xlu0 0
        %1446 = vperm.xlu0 %1445, %v1396
        %v1447 = vpop.permute.xlu0 %1446
        %1448 = vset.pattern.permute.xlu0 0
        %1449 = vperm.xlu0 %1448, %v1398
        %v1450 = vpop.permute.xlu0 %1449
        %1451 = vset.pattern.permute.xlu0 0
        %1452 = vperm.xlu0 %1451, %v1400
        %v1453 = vpop.permute.xlu0 %1452
        %1454 = vset.pattern.permute.xlu0 0
        %1455 = vperm.xlu0 %1454, %v1402
        %v1456 = vpop.permute.xlu0 %1455
        %1457 = vset.pattern.permute.xlu0 0
        %1458 = vperm.xlu0 %1457, %v1404
        %v1459 = vpop.permute.xlu0 %1458
        %1460 = vset.pattern.permute.xlu0 0
        %1461 = vperm.xlu0 %1460, %v1406
        %v1462 = vpop.permute.xlu0 %1461
        %1463 = vset.pattern.permute.xlu0 0
        %1464 = vperm.xlu0 %1463, %v1408
        %v1465 = vpop.permute.xlu0 %1464
        %1466 = vset.pattern.permute.xlu0 0
        %1467 = vperm.xlu0 %1466, %v1410
        %v1468 = vpop.permute.xlu0 %1467
        %1469 = vset.pattern.permute.xlu0 0
        %1470 = vperm.xlu0 %1469, %v1412
        %v1471 = vpop.permute.xlu0 %1470
        %1472 = vset.pattern.permute.xlu0 0
        %1473 = vperm.xlu0 %1472, %v1414
        %v1474 = vpop.permute.xlu0 %1473
        %1475 = vset.pattern.permute.xlu0 0
        %1476 = vperm.xlu0 %1475, %v1416
        %v1477 = vpop.permute.xlu0 %1476
        %1478 = vset.pattern.permute.xlu0 0
        %1479 = vperm.xlu0 %1478, %v1418
        %v1480 = vpop.permute.xlu0 %1479
        %1481 = vset.pattern.permute.xlu0 0
        %1482 = vperm.xlu0 %1481, %v1420
        %v1483 = vpop.permute.xlu0 %1482
        %1484 = vset.pattern.permute.xlu0 0
        %1485 = vperm.xlu0 %1484, %v1422
        %v1486 = vpop.permute.xlu0 %1485
        %v1487 = vlaneseq
        %v1488 = vshrl.u32 %v1487, 7
        %v1489 = vsub.s32 %v1198, %v1488
        %v1490 = vrot.slane %v1441, %v1489
        %v1491 = vlaneseq
        %v1492 = vshrl.u32 %v1491, 7
        %v1493 = vsub.s32 %v1198, %v1492
        %v1494 = vrot.slane %v1444, %v1493
        %v1495 = vlaneseq
        %v1496 = vshrl.u32 %v1495, 7
        %v1497 = vsub.s32 %v1198, %v1496
        %v1498 = vrot.slane %v1447, %v1497
        %v1499 = vlaneseq
        %v1500 = vshrl.u32 %v1499, 7
        %v1501 = vsub.s32 %v1198, %v1500
        %v1502 = vrot.slane %v1450, %v1501
        %v1503 = vlaneseq
        %v1504 = vshrl.u32 %v1503, 7
        %v1505 = vsub.s32 %v1198, %v1504
        %v1506 = vrot.slane %v1453, %v1505
        %v1507 = vlaneseq
        %v1508 = vshrl.u32 %v1507, 7
        %v1509 = vsub.s32 %v1198, %v1508
        %v1510 = vrot.slane %v1456, %v1509
        %v1511 = vlaneseq
        %v1512 = vshrl.u32 %v1511, 7
        %v1513 = vsub.s32 %v1198, %v1512
        %v1514 = vrot.slane %v1459, %v1513
        %v1515 = vlaneseq
        %v1516 = vshrl.u32 %v1515, 7
        %v1517 = vsub.s32 %v1198, %v1516
        %v1518 = vrot.slane %v1462, %v1517
        %v1519 = vlaneseq
        %v1520 = vshrl.u32 %v1519, 7
        %v1521 = vsub.s32 %v1198, %v1520
        %v1522 = vrot.slane %v1465, %v1521
        %v1523 = vlaneseq
        %v1524 = vshrl.u32 %v1523, 7
        %v1525 = vsub.s32 %v1198, %v1524
        %v1526 = vrot.slane %v1468, %v1525
        %v1527 = vlaneseq
        %v1528 = vshrl.u32 %v1527, 7
        %v1529 = vsub.s32 %v1198, %v1528
        %v1530 = vrot.slane %v1471, %v1529
        %v1531 = vlaneseq
        %v1532 = vshrl.u32 %v1531, 7
        %v1533 = vsub.s32 %v1198, %v1532
        %v1534 = vrot.slane %v1474, %v1533
        %v1535 = vlaneseq
        %v1536 = vshrl.u32 %v1535, 7
        %v1537 = vsub.s32 %v1198, %v1536
        %v1538 = vrot.slane %v1477, %v1537
        %v1539 = vlaneseq
        %v1540 = vshrl.u32 %v1539, 7
        %v1541 = vsub.s32 %v1198, %v1540
        %v1542 = vrot.slane %v1480, %v1541
        %v1543 = vlaneseq
        %v1544 = vshrl.u32 %v1543, 7
        %v1545 = vsub.s32 %v1198, %v1544
        %v1546 = vrot.slane %v1483, %v1545
        %v1547 = vlaneseq
        %v1548 = vshrl.u32 %v1547, 7
        %v1549 = vsub.s32 %v1198, %v1548
        %v1550 = vrot.slane %v1486, %v1549
        %v1551 = vsel %vm1263, %v1494, %v1490
        %v1552 = vsel %vm1265, %v1498, %v1551
        %v1553 = vsel %vm1267, %v1502, %v1552
        %v1554 = vsel %vm1269, %v1506, %v1553
        %v1555 = vsel %vm1271, %v1510, %v1554
        %v1556 = vsel %vm1273, %v1514, %v1555
        %v1557 = vsel %vm1275, %v1518, %v1556
        %v1558 = vsel %vm1263, %v1526, %v1522
        %v1559 = vsel %vm1265, %v1530, %v1558
        %v1560 = vsel %vm1267, %v1534, %v1559
        %v1561 = vsel %vm1269, %v1538, %v1560
        %v1562 = vsel %vm1271, %v1542, %v1561
        %v1563 = vsel %vm1273, %v1546, %v1562
        %v1564 = vsel %vm1275, %v1550, %v1563
        %v1567 = vsel %vm1286, %v1557, 0.0
        %1568 = vadd.xlane.f32.xlu0 %v1567
        %v1569 = vpop.xlane.xlu0 %1568
        %v1570 = vsel %vm1286, %v1564, 0.0
        %1571 = vadd.xlane.f32.xlu0 %v1570
        %v1572 = vpop.xlane.xlu0 %1571
        %v1575 = vlaneseq
        %v1576 = vshrl.u32 %v1575, 7
        %v1577 = vsub.s32 0, %v1576
        %v1578 = vrot.slane %v1569, %v1577
        %v1579 = vlaneseq
        %v1580 = vshrl.u32 %v1579, 7
        %v1581 = vsub.s32 1, %v1580
        %v1582 = vrot.slane %v1569, %v1581
        %v1583 = vlaneseq
        %v1584 = vshrl.u32 %v1583, 7
        %v1585 = vsub.s32 2, %v1584
        %v1586 = vrot.slane %v1569, %v1585
        %v1587 = vlaneseq
        %v1588 = vshrl.u32 %v1587, 7
        %v1589 = vsub.s32 3, %v1588
        %v1590 = vrot.slane %v1569, %v1589
        %v1591 = vlaneseq
        %v1592 = vshrl.u32 %v1591, 7
        %v1593 = vsub.s32 4, %v1592
        %v1594 = vrot.slane %v1569, %v1593
        %v1595 = vlaneseq
        %v1596 = vshrl.u32 %v1595, 7
        %v1597 = vsub.s32 5, %v1596
        %v1598 = vrot.slane %v1569, %v1597
        %v1599 = vlaneseq
        %v1600 = vshrl.u32 %v1599, 7
        %v1601 = vsub.s32 6, %v1600
        %v1602 = vrot.slane %v1569, %v1601
        %v1603 = vlaneseq
        %v1604 = vshrl.u32 %v1603, 7
        %v1605 = vsub.s32 7, %v1604
        %v1606 = vrot.slane %v1569, %v1605
        %v1607 = vlaneseq
        %v1608 = vshrl.u32 %v1607, 7
        %v1609 = vsub.s32 0, %v1608
        %v1610 = vrot.slane %v1572, %v1609
        %v1611 = vlaneseq
        %v1612 = vshrl.u32 %v1611, 7
        %v1613 = vsub.s32 1, %v1612
        %v1614 = vrot.slane %v1572, %v1613
        %v1615 = vlaneseq
        %v1616 = vshrl.u32 %v1615, 7
        %v1617 = vsub.s32 2, %v1616
        %v1618 = vrot.slane %v1572, %v1617
        %v1619 = vlaneseq
        %v1620 = vshrl.u32 %v1619, 7
        %v1621 = vsub.s32 3, %v1620
        %v1622 = vrot.slane %v1572, %v1621
        %v1623 = vlaneseq
        %v1624 = vshrl.u32 %v1623, 7
        %v1625 = vsub.s32 4, %v1624
        %v1626 = vrot.slane %v1572, %v1625
        %v1627 = vlaneseq
        %v1628 = vshrl.u32 %v1627, 7
        %v1629 = vsub.s32 5, %v1628
        %v1630 = vrot.slane %v1572, %v1629
        %v1631 = vlaneseq
        %v1632 = vshrl.u32 %v1631, 7
        %v1633 = vsub.s32 6, %v1632
        %v1634 = vrot.slane %v1572, %v1633
        %v1635 = vlaneseq
        %v1636 = vshrl.u32 %v1635, 7
        %v1637 = vsub.s32 7, %v1636
        %v1638 = vrot.slane %v1572, %v1637
        %v1655 = vrcp.pop %v1578
        %v1656 = vmul.f32 %v1392, %v1655
        %v1657 = vrcp.pop %v1582
        %v1658 = vmul.f32 %v1394, %v1657
        %v1659 = vrcp.pop %v1586
        %v1660 = vmul.f32 %v1396, %v1659
        %v1661 = vrcp.pop %v1590
        %v1662 = vmul.f32 %v1398, %v1661
        %v1663 = vrcp.pop %v1594
        %v1664 = vmul.f32 %v1400, %v1663
        %v1665 = vrcp.pop %v1598
        %v1666 = vmul.f32 %v1402, %v1665
        %v1667 = vrcp.pop %v1602
        %v1668 = vmul.f32 %v1404, %v1667
        %v1669 = vrcp.pop %v1606
        %v1670 = vmul.f32 %v1406, %v1669
        %v1671 = vrcp.pop %v1610
        %v1672 = vmul.f32 %v1408, %v1671
        %v1673 = vrcp.pop %v1614
        %v1674 = vmul.f32 %v1410, %v1673
        %v1675 = vrcp.pop %v1618
        %v1676 = vmul.f32 %v1412, %v1675
        %v1677 = vrcp.pop %v1622
        %v1678 = vmul.f32 %v1414, %v1677
        %v1679 = vrcp.pop %v1626
        %v1680 = vmul.f32 %v1416, %v1679
        %v1681 = vrcp.pop %v1630
        %v1682 = vmul.f32 %v1418, %v1681
        %v1683 = vrcp.pop %v1634
        %v1684 = vmul.f32 %v1420, %v1683
        %v1685 = vrcp.pop %v1638
        %v1686 = vmul.f32 %v1422, %v1685
        %v1687 = vunpack.c.l.bf16 %v605
        %v1688 = vunpack.c.l.bf16 %v606
        %v1689 = vunpack.c.l.bf16 %v607
        %v1690 = vunpack.c.l.bf16 %v608
        %v1691 = vunpack.c.l.bf16 %v609
        %v1692 = vunpack.c.l.bf16 %v610
        %v1693 = vunpack.c.l.bf16 %v611
        %v1694 = vunpack.c.l.bf16 %v612
        %v1695 = vunpack.c.l.bf16 %v613
        %v1696 = vunpack.c.l.bf16 %v614
        %v1697 = vunpack.c.l.bf16 %v615
        %v1698 = vunpack.c.l.bf16 %v616
        %v1699 = vunpack.c.l.bf16 %v617
        %v1700 = vunpack.c.l.bf16 %v618
        %v1701 = vunpack.c.l.bf16 %v619
        %v1702 = vunpack.c.l.bf16 %v620
        %1704 = vset.pattern.permute.xlu0 0
        %1705 = vperm.xlu0 %1704, %v1656
        %v1706 = vpop.permute.xlu0 %1705
        %1709 = vset.pattern.permute.xlu0 0
        %1710 = vperm.xlu0 %1709, %v1658
        %v1711 = vpop.permute.xlu0 %1710
        %1714 = vset.pattern.permute.xlu0 0
        %1715 = vperm.xlu0 %1714, %v1660
        %v1716 = vpop.permute.xlu0 %1715
        %1719 = vset.pattern.permute.xlu0 0
        %1720 = vperm.xlu0 %1719, %v1662
        %v1721 = vpop.permute.xlu0 %1720
        %1724 = vset.pattern.permute.xlu0 0
        %1725 = vperm.xlu0 %1724, %v1664
        %v1726 = vpop.permute.xlu0 %1725
        %1729 = vset.pattern.permute.xlu0 0
        %1730 = vperm.xlu0 %1729, %v1666
        %v1731 = vpop.permute.xlu0 %1730
        %1734 = vset.pattern.permute.xlu0 0
        %1735 = vperm.xlu0 %1734, %v1668
        %v1736 = vpop.permute.xlu0 %1735
        %1739 = vset.pattern.permute.xlu0 0
        %1740 = vperm.xlu0 %1739, %v1670
        %v1741 = vpop.permute.xlu0 %1740
        %1744 = vset.pattern.permute.xlu0 0
        %1745 = vperm.xlu0 %1744, %v1672
        %v1746 = vpop.permute.xlu0 %1745
        %1749 = vset.pattern.permute.xlu0 0
        %1750 = vperm.xlu0 %1749, %v1674
        %v1751 = vpop.permute.xlu0 %1750
        %1754 = vset.pattern.permute.xlu0 0
        %1755 = vperm.xlu0 %1754, %v1676
        %v1756 = vpop.permute.xlu0 %1755
        %1759 = vset.pattern.permute.xlu0 0
        %1760 = vperm.xlu0 %1759, %v1678
        %v1761 = vpop.permute.xlu0 %1760
        %1764 = vset.pattern.permute.xlu0 0
        %1765 = vperm.xlu0 %1764, %v1680
        %v1766 = vpop.permute.xlu0 %1765
        %1769 = vset.pattern.permute.xlu0 0
        %1770 = vperm.xlu0 %1769, %v1682
        %v1771 = vpop.permute.xlu0 %1770
        %1774 = vset.pattern.permute.xlu0 0
        %1775 = vperm.xlu0 %1774, %v1684
        %v1776 = vpop.permute.xlu0 %1775
        %1779 = vset.pattern.permute.xlu0 0
        %1780 = vperm.xlu0 %1779, %v1686
        %v1781 = vpop.permute.xlu0 %1780
        %v1783 = vmul.f32 %v1706, %v1687
        %v1784 = vmul.f32 %v1711, %v1688
        %v1785 = vmul.f32 %v1716, %v1689
        %v1786 = vmul.f32 %v1721, %v1690
        %v1787 = vmul.f32 %v1726, %v1691
        %v1788 = vmul.f32 %v1731, %v1692
        %v1789 = vmul.f32 %v1736, %v1693
        %v1790 = vmul.f32 %v1741, %v1694
        %v1791 = vmul.f32 %v1746, %v1695
        %v1792 = vmul.f32 %v1751, %v1696
        %v1793 = vmul.f32 %v1756, %v1697
        %v1794 = vmul.f32 %v1761, %v1698
        %v1795 = vmul.f32 %v1766, %v1699
        %v1796 = vmul.f32 %v1771, %v1700
        %v1797 = vmul.f32 %v1776, %v1701
        %v1798 = vmul.f32 %v1781, %v1702
        %v1799 = vsel %vm637, %v1783, 0.0
        %v1800 = vrot.slane %v1799, 4
        %v1801 = vadd.f32 %v1799, %v1800
        %v1802 = vrot.slane %v1801, 2
        %v1803 = vadd.f32 %v1801, %v1802
        %v1804 = vrot.slane %v1803, 1
        %v1805 = vadd.f32 %v1803, %v1804
        %v1806 = vsel %vm637, %v1784, 0.0
        %v1807 = vrot.slane %v1806, 4
        %v1808 = vadd.f32 %v1806, %v1807
        %v1809 = vrot.slane %v1808, 2
        %v1810 = vadd.f32 %v1808, %v1809
        %v1811 = vrot.slane %v1810, 1
        %v1812 = vadd.f32 %v1810, %v1811
        %v1813 = vsel %vm637, %v1785, 0.0
        %v1814 = vrot.slane %v1813, 4
        %v1815 = vadd.f32 %v1813, %v1814
        %v1816 = vrot.slane %v1815, 2
        %v1817 = vadd.f32 %v1815, %v1816
        %v1818 = vrot.slane %v1817, 1
        %v1819 = vadd.f32 %v1817, %v1818
        %v1820 = vsel %vm637, %v1786, 0.0
        %v1821 = vrot.slane %v1820, 4
        %v1822 = vadd.f32 %v1820, %v1821
        %v1823 = vrot.slane %v1822, 2
        %v1824 = vadd.f32 %v1822, %v1823
        %v1825 = vrot.slane %v1824, 1
        %v1826 = vadd.f32 %v1824, %v1825
        %v1827 = vsel %vm637, %v1787, 0.0
        %v1828 = vrot.slane %v1827, 4
        %v1829 = vadd.f32 %v1827, %v1828
        %v1830 = vrot.slane %v1829, 2
        %v1831 = vadd.f32 %v1829, %v1830
        %v1832 = vrot.slane %v1831, 1
        %v1833 = vadd.f32 %v1831, %v1832
        %v1834 = vsel %vm637, %v1788, 0.0
        %v1835 = vrot.slane %v1834, 4
        %v1836 = vadd.f32 %v1834, %v1835
        %v1837 = vrot.slane %v1836, 2
        %v1838 = vadd.f32 %v1836, %v1837
        %v1839 = vrot.slane %v1838, 1
        %v1840 = vadd.f32 %v1838, %v1839
        %v1841 = vsel %vm637, %v1789, 0.0
        %v1842 = vrot.slane %v1841, 4
        %v1843 = vadd.f32 %v1841, %v1842
        %v1844 = vrot.slane %v1843, 2
        %v1845 = vadd.f32 %v1843, %v1844
        %v1846 = vrot.slane %v1845, 1
        %v1847 = vadd.f32 %v1845, %v1846
        %v1848 = vsel %vm637, %v1790, 0.0
        %v1849 = vrot.slane %v1848, 4
        %v1850 = vadd.f32 %v1848, %v1849
        %v1851 = vrot.slane %v1850, 2
        %v1852 = vadd.f32 %v1850, %v1851
        %v1853 = vrot.slane %v1852, 1
        %v1854 = vadd.f32 %v1852, %v1853
        %v1855 = vsel %vm637, %v1791, 0.0
        %v1856 = vrot.slane %v1855, 4
        %v1857 = vadd.f32 %v1855, %v1856
        %v1858 = vrot.slane %v1857, 2
        %v1859 = vadd.f32 %v1857, %v1858
        %v1860 = vrot.slane %v1859, 1
        %v1861 = vadd.f32 %v1859, %v1860
        %v1862 = vsel %vm637, %v1792, 0.0
        %v1863 = vrot.slane %v1862, 4
        %v1864 = vadd.f32 %v1862, %v1863
        %v1865 = vrot.slane %v1864, 2
        %v1866 = vadd.f32 %v1864, %v1865
        %v1867 = vrot.slane %v1866, 1
        %v1868 = vadd.f32 %v1866, %v1867
        %v1869 = vsel %vm637, %v1793, 0.0
        %v1870 = vrot.slane %v1869, 4
        %v1871 = vadd.f32 %v1869, %v1870
        %v1872 = vrot.slane %v1871, 2
        %v1873 = vadd.f32 %v1871, %v1872
        %v1874 = vrot.slane %v1873, 1
        %v1875 = vadd.f32 %v1873, %v1874
        %v1876 = vsel %vm637, %v1794, 0.0
        %v1877 = vrot.slane %v1876, 4
        %v1878 = vadd.f32 %v1876, %v1877
        %v1879 = vrot.slane %v1878, 2
        %v1880 = vadd.f32 %v1878, %v1879
        %v1881 = vrot.slane %v1880, 1
        %v1882 = vadd.f32 %v1880, %v1881
        %v1883 = vsel %vm637, %v1795, 0.0
        %v1884 = vrot.slane %v1883, 4
        %v1885 = vadd.f32 %v1883, %v1884
        %v1886 = vrot.slane %v1885, 2
        %v1887 = vadd.f32 %v1885, %v1886
        %v1888 = vrot.slane %v1887, 1
        %v1889 = vadd.f32 %v1887, %v1888
        %v1890 = vsel %vm637, %v1796, 0.0
        %v1891 = vrot.slane %v1890, 4
        %v1892 = vadd.f32 %v1890, %v1891
        %v1893 = vrot.slane %v1892, 2
        %v1894 = vadd.f32 %v1892, %v1893
        %v1895 = vrot.slane %v1894, 1
        %v1896 = vadd.f32 %v1894, %v1895
        %v1897 = vsel %vm637, %v1797, 0.0
        %v1898 = vrot.slane %v1897, 4
        %v1899 = vadd.f32 %v1897, %v1898
        %v1900 = vrot.slane %v1899, 2
        %v1901 = vadd.f32 %v1899, %v1900
        %v1902 = vrot.slane %v1901, 1
        %v1903 = vadd.f32 %v1901, %v1902
        %v1904 = vsel %vm637, %v1798, 0.0
        %v1905 = vrot.slane %v1904, 4
        %v1906 = vadd.f32 %v1904, %v1905
        %v1907 = vrot.slane %v1906, 2
        %v1908 = vadd.f32 %v1906, %v1907
        %v1909 = vrot.slane %v1908, 1
        %v1910 = vadd.f32 %v1908, %v1909
        %v1911 = vpack.c.bf16 %v1805, %v1805
        %v1912 = vpack.c.bf16 %v1812, %v1812
        %v1913 = vpack.c.bf16 %v1819, %v1819
        %v1914 = vpack.c.bf16 %v1826, %v1826
        %v1915 = vpack.c.bf16 %v1833, %v1833
        %v1916 = vpack.c.bf16 %v1840, %v1840
        %v1917 = vpack.c.bf16 %v1847, %v1847
        %v1918 = vpack.c.bf16 %v1854, %v1854
        %v1919 = vpack.c.bf16 %v1861, %v1861
        %v1920 = vpack.c.bf16 %v1868, %v1868
        %v1921 = vpack.c.bf16 %v1875, %v1875
        %v1922 = vpack.c.bf16 %v1882, %v1882
        %v1923 = vpack.c.bf16 %v1889, %v1889
        %v1924 = vpack.c.bf16 %v1896, %v1896
        %v1925 = vpack.c.bf16 %v1903, %v1903
        %v1926 = vpack.c.bf16 %v1910, %v1910
        %v1927 = vld [vmem:[%s8] sm:$0xf]
        %v1928 = vld [vmem:[%s8 + $0x4] sm:$0xf]
        %v1929 = vld [vmem:[%s8 + $0x8] sm:$0xf]
        %v1930 = vld [vmem:[%s8 + $0xc] sm:$0xf]
        %v1931 = vld [vmem:[%s9] sm:$0xf]
        %v1932 = vld [vmem:[%s9 + $0x4] sm:$0xf]
        %v1933 = vld [vmem:[%s9 + $0x8] sm:$0xf]
        %v1934 = vld [vmem:[%s9 + $0xc] sm:$0xf]
        %v1951 = vunpack.c.l.b16 %v1911
        %v1952 = vunpack.c.l.b16 %v1912
        %v1953 = vunpack.c.l.b16 %v1913
        %v1954 = vunpack.c.l.b16 %v1914
        %v1955 = vunpack.c.l.b16 %v1915
        %v1956 = vunpack.c.l.b16 %v1916
        %v1957 = vunpack.c.l.b16 %v1917
        %v1958 = vunpack.c.l.b16 %v1918
        %v1959 = vunpack.c.l.b16 %v1919
        %v1960 = vunpack.c.l.b16 %v1920
        %v1961 = vunpack.c.l.b16 %v1921
        %v1962 = vunpack.c.l.b16 %v1922
        %v1963 = vunpack.c.l.b16 %v1923
        %v1964 = vunpack.c.l.b16 %v1924
        %v1965 = vunpack.c.l.b16 %v1925
        %v1966 = vunpack.c.l.b16 %v1926
        %v1967 = vsel %vm1263, %v1952, %v1951
        %v1968 = vsel %vm1265, %v1953, %v1967
        %v1969 = vsel %vm1267, %v1954, %v1968
        %v1970 = vsel %vm1269, %v1955, %v1969
        %v1971 = vsel %vm1271, %v1956, %v1970
        %v1972 = vsel %vm1273, %v1957, %v1971
        %v1973 = vsel %vm1275, %v1958, %v1972
        %v1974 = vsel %vm1263, %v1960, %v1959
        %v1975 = vsel %vm1265, %v1961, %v1974
        %v1976 = vsel %vm1267, %v1962, %v1975
        %v1977 = vsel %vm1269, %v1963, %v1976
        %v1978 = vsel %vm1271, %v1964, %v1977
        %v1979 = vsel %vm1273, %v1965, %v1978
        %v1980 = vsel %vm1275, %v1966, %v1979
        %v1981 = vpack.c.b16 %v1980, %v1973
        %v1986 = vunpack.c.l.b16 %v1931
        %v1987 = vunpack.c.l.b16 %v1932
        %v1988 = vunpack.c.l.b16 %v1933
        %v1989 = vunpack.c.l.b16 %v1934
        %v1990 = vpack.c.b16 %v1987, %v1986
        %v1991 = vpack.c.b16 %v1989, %v1988
        %v1995 = vsel %vm637, %v1981, 0
        %1997 = vmatprep.subr.bf16.mxu0 0
        %1998 = vmatpush1.bf16.msra.mxu0 %v1990
        %1999 = vmatprep.subr.bf16.mxu0 0
        %2000 = vmatpush1.bf16.msra.mxu0 %v1991
        %2001 = vmatprep.subr.bf16.mxu0 0
        %2002 = vmatpush1.bf16.msra.mxu0 0
        %2003 = vmatprep.subr.bf16.mxu0 0
        %2004 = vmatpush1.bf16.msra.mxu0 0
        %2005 = vmatprep.subr.bf16.mxu0 0
        %2006 = vmatpush1.bf16.msra.mxu0 0
        %2007 = vmatprep.subr.bf16.mxu0 0
        %2008 = vmatpush1.bf16.msra.mxu0 0
        %2009 = vmatprep.subr.bf16.mxu0 0
        %2010 = vmatpush1.bf16.msra.mxu0 0
        %2011 = vmatprep.subr.bf16.mxu0 0
        %2012 = vmatpush1.bf16.msra.mxu0 0
        %2013 = vmatprep.subr.bf16.mxu0 0
        %2014 = vmatpush1.bf16.msra.mxu0 0
        %2015 = vmatprep.subr.bf16.mxu0 0
        %2016 = vmatpush1.bf16.msra.mxu0 0
        %2017 = vmatprep.subr.bf16.mxu0 0
        %2018 = vmatpush1.bf16.msra.mxu0 0
        %2019 = vmatprep.subr.bf16.mxu0 0
        %2020 = vmatpush1.bf16.msra.mxu0 0
        %2021 = vmatprep.subr.bf16.mxu0 0
        %2022 = vmatpush1.bf16.msra.mxu0 0
        %2023 = vmatprep.subr.bf16.mxu0 0
        %2024 = vmatpush1.bf16.msra.mxu0 0
        %2025 = vmatprep.subr.bf16.mxu0 0
        %2026 = vmatpush1.bf16.msra.mxu0 0
        %2027 = vmatprep.subr.bf16.mxu0 0
        %2028 = vmatpush1.bf16.msra.mxu0 0
        %2029 = vmatprep.mubr.bf16.mxu0 0
        %2030 = vmatmul.mubr.bf16.gmra.mrb[0].mxu0 %v1995
        %v2031 = vpop.f32.mrb[0].mxu0
        %v2032 = vadd.f32 0.0, %v2031
        %v2033 = vpop.f32.mrb[0].mxu0
        %v2034 = vpop.f32.mrb[0].mxu0
        %v2035 = vadd.f32 0.0, %v2034
        %v2036 = vpop.f32.mrb[0].mxu0
        %2037 = vdwg.mxu0
        %v2040 = vunpack.c.l.b16 %v600
        %v2041 = vunpack.c.l.b16 %v601
        %v2042 = vpack.c.b16 %v2041, %v2040
        %v2047 = vunpack.c.l.b16 %v1927
        %v2048 = vunpack.c.l.b16 %v1928
        %v2049 = vunpack.c.l.b16 %v1929
        %v2050 = vunpack.c.l.b16 %v1930
        %v2051 = vpack.c.b16 %v2048, %v2047
        %v2052 = vpack.c.b16 %v2050, %v2049
        %v2056 = vsel %vm637, %v2042, 0
        %2058 = vmatprep.subr.bf16.mxu0 0
        %2059 = vmatpush1.bf16.msra.mxu0 %v2051
        %2060 = vmatprep.subr.bf16.mxu0 0
        %2061 = vmatpush1.bf16.msra.mxu0 %v2052
        %2062 = vmatprep.subr.bf16.mxu0 0
        %2063 = vmatpush1.bf16.msra.mxu0 0
        %2064 = vmatprep.subr.bf16.mxu0 0
        %2065 = vmatpush1.bf16.msra.mxu0 0
        %2066 = vmatprep.subr.bf16.mxu0 0
        %2067 = vmatpush1.bf16.msra.mxu0 0
        %2068 = vmatprep.subr.bf16.mxu0 0
        %2069 = vmatpush1.bf16.msra.mxu0 0
        %2070 = vmatprep.subr.bf16.mxu0 0
        %2071 = vmatpush1.bf16.msra.mxu0 0
        %2072 = vmatprep.subr.bf16.mxu0 0
        %2073 = vmatpush1.bf16.msra.mxu0 0
        %2074 = vmatprep.subr.bf16.mxu0 0
        %2075 = vmatpush1.bf16.msra.mxu0 0
        %2076 = vmatprep.subr.bf16.mxu0 0
        %2077 = vmatpush1.bf16.msra.mxu0 0
        %2078 = vmatprep.subr.bf16.mxu0 0
        %2079 = vmatpush1.bf16.msra.mxu0 0
        %2080 = vmatprep.subr.bf16.mxu0 0
        %2081 = vmatpush1.bf16.msra.mxu0 0
        %2082 = vmatprep.subr.bf16.mxu0 0
        %2083 = vmatpush1.bf16.msra.mxu0 0
        %2084 = vmatprep.subr.bf16.mxu0 0
        %2085 = vmatpush1.bf16.msra.mxu0 0
        %2086 = vmatprep.subr.bf16.mxu0 0
        %2087 = vmatpush1.bf16.msra.mxu0 0
        %2088 = vmatprep.subr.bf16.mxu0 0
        %2089 = vmatpush1.bf16.msra.mxu0 0
        %2090 = vmatprep.mubr.bf16.mxu0 0
        %2091 = vmatmul.mubr.bf16.gmra.mrb[0].mxu0 %v2056
        %v2092 = vpop.f32.mrb[0].mxu0
        %v2093 = vadd.f32 %v2032, %v2092
        %v2094 = vpop.f32.mrb[0].mxu0
        %v2095 = vpop.f32.mrb[0].mxu0
        %v2096 = vadd.f32 %v2035, %v2095
        %v2097 = vpop.f32.mrb[0].mxu0
        %2098 = vdwg.mxu0
        %v2099 = vld [vmem:[%s11] sm:$0x1]
        %v2101 = vlaneseq
        %v2102 = vshrl.u32 %v2101, 7
        %v2103 = vsub.s32 0, %v2102
        %v2104 = vrot.slane %v2099, %v2103
        %v2106 = vadd.f32 %v2093, %v2104
        %v2107 = vadd.f32 %v2096, %v2104
        %v2108 = vld [vmem:[%s10] sm:$0xf]
        %v2109 = vld [vmem:[%s10 + $0x4] sm:$0xf]
        %v2110 = vld [vmem:[%s10 + $0x8] sm:$0xf]
        %v2111 = vld [vmem:[%s10 + $0xc] sm:$0xf]
        %v2112 = vld [vmem:[%s12] sm:$0x1]
        %v2114 = vlaneseq
        %v2115 = vshrl.u32 %v2114, 7
        %v2116 = vsub.s32 0, %v2115
        %v2117 = vrot.slane %v2112, %v2116
        %v2123 = vunpack.c.l.b16 %v2108
        %v2124 = vunpack.c.l.b16 %v2109
        %v2125 = vunpack.c.l.b16 %v2110
        %v2126 = vunpack.c.l.b16 %v2111
        %v2127 = vpack.c.b16 %v2124, %v2123
        %v2128 = vpack.c.b16 %v2126, %v2125
        %2131 = vmatprep.subr.bf16.mxu0 0
        %2132 = vmatpush1.bf16.msra.mxu0 %v2127
        %2133 = vmatprep.subr.bf16.mxu0 0
        %2134 = vmatpush1.bf16.msra.mxu0 %v2128
        %2135 = vmatprep.subr.bf16.mxu0 0
        %2136 = vmatpush1.bf16.msra.mxu0 0
        %2137 = vmatprep.subr.bf16.mxu0 0
        %2138 = vmatpush1.bf16.msra.mxu0 0
        %2139 = vmatprep.subr.bf16.mxu0 0
        %2140 = vmatpush1.bf16.msra.mxu0 0
        %2141 = vmatprep.subr.bf16.mxu0 0
        %2142 = vmatpush1.bf16.msra.mxu0 0
        %2143 = vmatprep.subr.bf16.mxu0 0
        %2144 = vmatpush1.bf16.msra.mxu0 0
        %2145 = vmatprep.subr.bf16.mxu0 0
        %2146 = vmatpush1.bf16.msra.mxu0 0
        %2147 = vmatprep.subr.bf16.mxu0 0
        %2148 = vmatpush1.bf16.msra.mxu0 0
        %2149 = vmatprep.subr.bf16.mxu0 0
        %2150 = vmatpush1.bf16.msra.mxu0 0
        %2151 = vmatprep.subr.bf16.mxu0 0
        %2152 = vmatpush1.bf16.msra.mxu0 0
        %2153 = vmatprep.subr.bf16.mxu0 0
        %2154 = vmatpush1.bf16.msra.mxu0 0
        %2155 = vmatprep.subr.bf16.mxu0 0
        %2156 = vmatpush1.bf16.msra.mxu0 0
        %2157 = vmatprep.subr.bf16.mxu0 0
        %2158 = vmatpush1.bf16.msra.mxu0 0
        %2159 = vmatprep.subr.bf16.mxu0 0
        %2160 = vmatpush1.bf16.msra.mxu0 0
        %2161 = vmatprep.subr.bf16.mxu0 0
        %2162 = vmatpush1.bf16.msra.mxu0 0
        %2163 = vmatprep.mubr.bf16.mxu0 0
        %2164 = vmatmul.mubr.bf16.gmra.mrb[0].mxu0 %v639
        %v2165 = vpop.f32.mrb[0].mxu0
        %v2166 = vadd.f32 %v2117, %v2165
        %v2167 = vpop.f32.mrb[0].mxu0
        %v2168 = vpop.f32.mrb[0].mxu0
        %v2169 = vadd.f32 %v2117, %v2168
        %v2170 = vpop.f32.mrb[0].mxu0
        %2171 = vdwg.mxu0
        %v2172 = vadd.f32 %v2106, %v2166
        %v2173 = vadd.f32 %v2107, %v2169
        %v2174 = vxor.u32 %v2172, 2147483648
        %v2175 = vxor.u32 %v2173, 2147483648
        %v2176 = vmul.f32 %v2174, 1.442695
        %v2177 = vpow.pop %v2176
        %v2178 = vmul.f32 %v2175, 1.442695
        %v2179 = vpow.pop %v2178
        %v2180 = vadd.f32 %v2177, 1.0
        %v2181 = vadd.f32 %v2179, 1.0
        %v2182 = vrcp.pop %v2180
        %v2183 = vmul.f32 1.0, %v2182
        %v2184 = vrcp.pop %v2181
        %v2185 = vmul.f32 1.0, %v2184
        %2188 = vrot.lane.b32.xlu0 %v2166, 64
        %v2189 = vpop.permute.xlu0 %2188
        %2190 = vrot.lane.b32.xlu0 %v2169, 64
        %v2191 = vpop.permute.xlu0 %2190
        %v2194 = vmul.f32 %v2183, %v2189
        %v2195 = vmul.f32 %v2185, %v2191
        %2198 = vrot.lane.b32.xlu0 %v2194, 64
        %v2199 = vpop.permute.xlu0 %2198
        %2200 = vrot.lane.b32.xlu0 %v2195, 64
        %v2201 = vpop.permute.xlu0 %2200
        %v2204 = vadd.f32 %v2106, %v2199
        %v2205 = vadd.f32 %v2107, %v2201
        %v2206 = vtanh.pop %v2204
        %v2207 = vtanh.pop %v2205
        %v2208 = vsub.f32 1.0, %v2183
        %v2209 = vsub.f32 1.0, %v2185
        %2212 = vrot.lane.b32.xlu0 %v2206, 96
        %v2213 = vpop.permute.xlu0 %2212
        %2214 = vrot.lane.b32.xlu0 %v2207, 96
        %v2215 = vpop.permute.xlu0 %2214
        %v2218 = vmul.f32 %v2208, %v2213
        %v2219 = vmul.f32 %v2209, %v2215
        %2222 = vrot.lane.b32.xlu0 %v602, 32
        %v2223 = vpop.permute.xlu0 %2222
        %2224 = vrot.lane.b32.xlu0 %v603, 32
        %v2225 = vpop.permute.xlu0 %2224
        %v2228 = vmul.f32 %v2183, %v2223
        %v2229 = vmul.f32 %v2185, %v2225
        %v2230 = vadd.f32 %v2218, %v2228
        %v2231 = vadd.f32 %v2219, %v2229
        %2234 = vrot.lane.b32.xlu0 %v2230, 96
        %v2235 = vpop.permute.xlu0 %2234
        %2236 = vrot.lane.b32.xlu0 %v2231, 96
        %v2237 = vpop.permute.xlu0 %2236
        %2240 = vst.msk [vmem:[#allocation2] sm:$0xff] %vm637, %v2235
        %2241 = vst.msk [vmem:[#allocation2 + $0x8] sm:$0xff] %vm637, %v2237
        %2242 = vst.msk [vmem:[%s585] sm:$0xff] %vm637, %v2235
        %2243 = vst.msk [vmem:[%s585 + $0x8] sm:$0xff] %vm637, %v2237
        %v2244 = vpack.c.bf16 %v2231, %v2230
        %2246 = vrot.lane.b32.xlu0 %v2244, 96
        %v2247 = vpop.permute.xlu0 %2246
        %2248 = vrot.lane.b32.xlu0 %v1981, 32
        %v2249 = vpop.permute.xlu0 %2248
        %2250 = vrot.lane.b32.xlu0 %v2042, 64
        %v2251 = vpop.permute.xlu0 %2250
        %v2254 = vsel %vm637, %v2247, %v2249
        %vm2255 = vcmask 523264
        %v2257 = vsel %vm2255, %v2254, %v2251
        %vm2259 = vcmask 785408
        %2260 = vst.msk [vmem:[#allocation3] sm:$0xff] %vm2259, %v2257
      $region84: #{decoder_decode.1} parent=79 // pred_fallthru
        _
      %v2261 = vld [vmem:[#allocation3] sm:$0xff]
      %v2262 = vld [vmem:[%s569] sm:$0xf]
      %v2263 = vld [vmem:[%s569 + $0x4] sm:$0xf]
      %v2264 = vld [vmem:[%s569 + $0x8] sm:$0xf]
      %v2265 = vld [vmem:[%s569 + $0xc] sm:$0xf]
      %v2266 = vld [vmem:[%s569 + $0x10] sm:$0xf]
      %v2267 = vld [vmem:[%s569 + $0x14] sm:$0xf]
      %v2268 = vld [vmem:[%s569 + $0x18] sm:$0xf]
      %v2269 = vld [vmem:[%s569 + $0x1c] sm:$0xf]
      %v2270 = vld [vmem:[%s569 + $0x20] sm:$0xf]
      %v2271 = vld [vmem:[%s569 + $0x24] sm:$0xf]
      %v2272 = vld [vmem:[%s569 + $0x28] sm:$0xf]
      %v2273 = vld [vmem:[%s569 + $0x2c] sm:$0xf]
      %v2274 = vld [vmem:[%s572] sm:$0x1]
      %v2276 = vlaneseq
      %v2277 = vshrl.u32 %v2276, 7
      %v2278 = vsub.s32 0, %v2277
      %v2279 = vrot.slane %v2274, %v2278
      %v2293 = vunpack.c.l.b16 %v2262
      %v2294 = vunpack.c.l.b16 %v2263
      %v2295 = vunpack.c.l.b16 %v2264
      %v2296 = vunpack.c.l.b16 %v2265
      %v2297 = vunpack.c.l.b16 %v2266
      %v2298 = vunpack.c.l.b16 %v2267
      %v2299 = vunpack.c.l.b16 %v2268
      %v2300 = vunpack.c.l.b16 %v2269
      %v2301 = vunpack.c.l.b16 %v2270
      %v2302 = vunpack.c.l.b16 %v2271
      %v2303 = vunpack.c.l.b16 %v2272
      %v2304 = vunpack.c.l.b16 %v2273
      %v2305 = vpack.c.b16 %v2294, %v2293
      %v2306 = vpack.c.b16 %v2296, %v2295
      %v2307 = vpack.c.b16 %v2298, %v2297
      %v2308 = vpack.c.b16 %v2300, %v2299
      %v2309 = vpack.c.b16 %v2302, %v2301
      %v2310 = vpack.c.b16 %v2304, %v2303
      %vm2317 = vcmask 785408
      %v2319 = vsel %vm2317, %v2261, 0
      %2321 = vmatprep.subr.bf16.mxu0 0
      %2322 = vmatpush1.bf16.msra.mxu0 %v2305
      %2323 = vmatprep.subr.bf16.mxu0 0
      %2324 = vmatpush1.bf16.msra.mxu0 %v2306
      %2325 = vmatprep.subr.bf16.mxu0 0
      %2326 = vmatpush1.bf16.msra.mxu0 %v2307
      %2327 = vmatprep.subr.bf16.mxu0 0
      %2328 = vmatpush1.bf16.msra.mxu0 %v2308
      %2329 = vmatprep.subr.bf16.mxu0 0
      %2330 = vmatpush1.bf16.msra.mxu0 %v2309
      %2331 = vmatprep.subr.bf16.mxu0 0
      %2332 = vmatpush1.bf16.msra.mxu0 %v2310
      %2333 = vmatprep.subr.bf16.mxu0 0
      %2334 = vmatpush1.bf16.msra.mxu0 0
      %2335 = vmatprep.subr.bf16.mxu0 0
      %2336 = vmatpush1.bf16.msra.mxu0 0
      %2337 = vmatprep.subr.bf16.mxu0 0
      %2338 = vmatpush1.bf16.msra.mxu0 0
      %2339 = vmatprep.subr.bf16.mxu0 0
      %2340 = vmatpush1.bf16.msra.mxu0 0
      %2341 = vmatprep.subr.bf16.mxu0 0
      %2342 = vmatpush1.bf16.msra.mxu0 0
      %2343 = vmatprep.subr.bf16.mxu0 0
      %2344 = vmatpush1.bf16.msra.mxu0 0
      %2345 = vmatprep.subr.bf16.mxu0 0
      %2346 = vmatpush1.bf16.msra.mxu0 0
      %2347 = vmatprep.subr.bf16.mxu0 0
      %2348 = vmatpush1.bf16.msra.mxu0 0
      %2349 = vmatprep.subr.bf16.mxu0 0
      %2350 = vmatpush1.bf16.msra.mxu0 0
      %2351 = vmatprep.subr.bf16.mxu0 0
      %2352 = vmatpush1.bf16.msra.mxu0 0
      %2353 = vmatprep.mubr.bf16.mxu0 0
      %2354 = vmatmul.mubr.bf16.gmra.mrb[0].mxu0 %v2319
      %v2355 = vpop.f32.mrb[0].mxu0
      %v2356 = vadd.f32 %v2279, %v2355
      %v2357 = vpop.f32.mrb[0].mxu0
      %v2358 = vpop.f32.mrb[0].mxu0
      %v2359 = vadd.f32 %v2279, %v2358
      %v2360 = vpop.f32.mrb[0].mxu0
      %2361 = vdwg.mxu0
      %2362 = vst [vmem:[%s580] sm:$0xff] %v2356
      %2363 = vst [vmem:[%s580 + $0x8] sm:$0xff] %v2359
      %p2364 = scmp.lt.s32.totalorder %s32, 3
      %s2365 = scalar_select %p2364, %s32, 3
      %p2366 = scmp.lt.s32.totalorder %s33, 0
      %s2367 = scalar_select %p2366, %s33, 0
      %s2368 = smul.addr %s2365, 2
      %s2369 = sadd.s32 %s2367, %s2368
      %s2370 = smul.addr %s2369, 8
      %s2371 = scalar_lea.vmem %s15, %s2370
      %p2372 = scmp.lt.s32.totalorder %s32, 3
      %s2373 = scalar_select %p2372, %s32, 3
      %s2374 = smul.addr %s2373, 2
      %s2375 = smul.addr %s2374, 8
      %s2376 = scalar_lea.vmem %s16, %s2375
      // Predicated region
      $region89: #{decoder_decode.1} parent=79 // pred_check
        %p2377 = pneg %p390
      $region90: #{decoder_decode.1} parent=79 // pred_check_branch
        %2379 = sbr.rel (%p2377) target = $region92
      $region91: #{decoder_decode.1} parent=79 // pred_region
        _
      $region92: #{decoder_decode.1} parent=79 // pred_fallthru
        _
      // Predicated region
      $region93: #{decoder_decode.1} parent=79 // pred_check
        %p2380 = pneg %p416
      $region94: #{decoder_decode.1} parent=79 // pred_check_branch
        %2382 = sbr.rel (%p2380) target = $region96
      $region95: #{decoder_decode.1} parent=79 // pred_region
        _
      $region96: #{decoder_decode.1} parent=79 // pred_fallthru
        _
    $region80: #{decoder_decode.1} parent=5 // pred_fallthru
      _
    %p2383 = scmp.le.s32.totalorder 2, %s23
    // Predicated region
    $region97: #{decoder_decode.1} parent=5 // pred_check
      %p2384 = pneg %p2383
    $region98: #{decoder_decode.1} parent=5 // pred_check_branch
      %2386 = sbr.rel (%p2384) target = $region100
    $region99: #{decoder_decode.1} parent=5 // pred_region
      %s2387 = ssub.s32 %s23, 2
      // Predicated region
      $region101: #{decoder_decode.1} parent=99 // pred_check
        %p2388 = pneg %p396
      $region102: #{decoder_decode.1} parent=99 // pred_check_branch
        %2390 = sbr.rel (%p2388) target = $region104
      $region103: #{decoder_decode.1} parent=99 // pred_region
        %p2391 = scmp.lt.s32.totalorder %s34, 3
        %s2392 = scalar_select %p2391, %s34, 3
        %p2393 = scmp.lt.s32.totalorder %s35, 0
        %s2394 = scalar_select %p2393, %s35, 0
        %s2395 = smul.addr %s2392, 2
        %s2396 = sadd.s32 %s2394, %s2395
        %s2397 = smul.addr %s2396, 8
        %s2398 = scalar_lea.vmem %s15, %s2397
      $region104: #{decoder_decode.1} parent=99 // pred_fallthru
        _
      // Predicated region
      $region105: #{decoder_decode.1} parent=99 // pred_check
        %p2399 = pneg %p422
      $region106: #{decoder_decode.1} parent=99 // pred_check_branch
        %2401 = sbr.rel (%p2399) target = $region108
      $region107: #{decoder_decode.1} parent=99 // pred_region
        %p2402 = scmp.lt.s32.totalorder %s34, 3
        %s2403 = scalar_select %p2402, %s34, 3
        %s2404 = smul.addr %s2403, 2
        %s2405 = smul.addr %s2404, 8
        %s2406 = scalar_lea.vmem %s16, %s2405
      $region108: #{decoder_decode.1} parent=99 // pred_fallthru
        _
    $region100: #{decoder_decode.1} parent=5 // pred_fallthru
      _
  $region6: #{decoder_decode.1} parent=0 // loop_footer
    %s27 = sadd.s32 1, %s23
  $region7: #{decoder_decode.1} parent=0 // loop_footer_branch
    %22 = sbr.rel target = $region3
  $region8: #{decoder_decode.1} parent=0 // loop_exit
    _

</llo_original>
